<compile_context>
chip_gen: v5e
topology: v5e:2x2
jax: 0.10.0
libtpu: 0.0.40
codegen_flags: <defaults>
</compile_context>

<pallas_src>
import functools

import jax
import jax.numpy as jnp
from jax.experimental import pallas as pl
from jax.experimental.pallas import tpu as pltpu

# Keep the whole bf16 x resident in VMEM when it is at most this many bytes.
_X_RESIDENT_BYTES = 8 * 1024 * 1024


def _round_up(x, m):
    return (x + m - 1) // m * m


def _choose_tiles(n):
    """Pick (TM, TK): dst tile and src/reduction tile (TK a multiple of TM)."""
    n128 = _round_up(max(n, 1), 128)
    # dst tile: large enough to amortize per-step overhead, but keep >=2 dst
    # tiles whenever the graph allows it so both v7x TensorCores get work.
    tm = min(512, n128)
    if n128 >= 256:
        tm = min(tm, _round_up(n128 // 2, 128))
    # reduction tile: large to cut grid-step / DMA-issue overhead; a multiple
    # of TM so one padded N works for both grid axes.
    tk = min(2048, _round_up(n128, tm))
    tk = _round_up(tk, tm)
    return tm, tk


def _elu(x):
    # ELU(alpha=1): x if x > 0 else exp(x) - 1.
    # exp runs on the EUP slot; the inner where clamps the unselected branch.
    neg = jnp.exp(jnp.where(x > 0, 0.0, x)) - 1.0
    return jnp.where(x > 0, x, neg)


def make_gnn_kernel(num_hidden, *, resident, tk):
    """Tiled kernel.

    Grid: (dst_tile i  [parallel], src_tile k  [arbitrary / reduction]).

    ref order:
      adj (TM,TK) bf16,
      x_src bf16  (full (NP,Fp) if resident else (TK,Fp) tile),
      x_dst (TM,Fp) bf16,
      w_self (Fp,H0p), w_msg (Fp,H0p), b_in (1,H0p),
      [w_h0, b_h0, ...]  (num_hidden pairs),
      w_out (Hp,Op), b_out (1,Op), o_ref (TM,Op),
      msg_acc (TM,Fp) f32 scratch.

    The input Linear's weight is pre-split into a "self" half (applied to x)
    and a "msg" half (applied to the aggregated messages), which is exactly
    Linear(concat([x, msg], dim=1)).
    """

    def kernel(adj_ref, xs_ref, xd_ref, w_self_ref, w_msg_ref, b_in_ref, *refs):
        hidden_refs = refs[: 2 * num_hidden]
        w_out_ref, b_out_ref, o_ref, msg_acc = refs[2 * num_hidden:]

        k = pl.program_id(1)

        @pl.when(k == 0)
        def _():
            msg_acc[...] = jnp.zeros_like(msg_acc)

        if resident:
            # whole x lives in VMEM; slice the current src window.
            start = pl.multiple_of(k * tk, tk)
            xs = xs_ref[pl.ds(start, tk), :]
        else:
            xs = xs_ref[...]

        # message passing: scatter-add over edges == adj @ x, bf16 MXU, f32 acc.
        msg_acc[...] += jnp.dot(adj_ref[...], xs,
                                preferred_element_type=jnp.float32)

        @pl.when(k == pl.num_programs(1) - 1)
        def _():
            x = xd_ref[...].astype(jnp.float32)   # VPU upcast, hidden under DMA/MXU
            # input layer: Linear(concat([x, msg])) == x @ W_self + msg @ W_msg + b
            h = (jnp.dot(x, w_self_ref[...], preferred_element_type=jnp.float32)
                 + jnp.dot(msg_acc[...], w_msg_ref[...],
                           preferred_element_type=jnp.float32)
                 + b_in_ref[...])
            h = _elu(h)

            for i in range(num_hidden):
                w = hidden_refs[2 * i][...]
                b = hidden_refs[2 * i + 1][...]
                h = _elu(jnp.dot(h, w, preferred_element_type=jnp.float32) + b)

            out = jnp.dot(h, w_out_ref[...],
                          preferred_element_type=jnp.float32) + b_out_ref[...]
            o_ref[...] = out.astype(o_ref.dtype)

    return kernel


def _pad2(a, rows, cols):
    a = jnp.asarray(a, jnp.float32)
    return jnp.zeros((rows, cols), jnp.float32).at[:a.shape[0], :a.shape[1]].set(a)


def prepare_params(params, feat_dim):
    """One-time conversion of torch-Linear-shaped params into kernel layout.

    Transposes to [in, out], splits the input layer into self/msg halves, and
    zero-pads every feature dim to a multiple of 128 (zeros propagate cleanly
    through ELU, so padded lanes stay exactly 0).
    Returns (prep_pytree, out_dim).
    """
    F = feat_dim
    F_pad = _round_up(F, 128)

    w_in = jnp.asarray(params["w_in"], jnp.float32)      # [H0, 2F] (torch [out,in])
    H0 = w_in.shape[0]
    H0_pad = _round_up(H0, 128)
    w_self = _pad2(w_in[:, :F].T, F_pad, H0_pad)          # [F_pad, H0_pad]
    w_msg = _pad2(w_in[:, F:].T, F_pad, H0_pad)           # [F_pad, H0_pad]
    b_in = _pad2(jnp.asarray(params["b_in"]).reshape(1, -1), 1, H0_pad)

    hidden = []
    prev_pad = H0_pad
    for w_h, b_h in params["hidden"]:                     # torch: [out, in], [out]
        out_w = w_h.shape[0]
        out_pad = _round_up(out_w, 128)
        hidden.append((_pad2(jnp.asarray(w_h).T, prev_pad, out_pad),
                       _pad2(jnp.asarray(b_h).reshape(1, -1), 1, out_pad)))
        prev_pad = out_pad

    w_out = jnp.asarray(params["w_out"], jnp.float32)     # [O, H_last]
    out_dim = w_out.shape[0]
    O_pad = _round_up(out_dim, 128)
    w_out_p = _pad2(w_out.T, prev_pad, O_pad)
    b_out_p = _pad2(jnp.asarray(params["b_out"]).reshape(1, -1), 1, O_pad)

    prep = {"w_self": w_self, "w_msg": w_msg, "b_in": b_in,
            "hidden": tuple(hidden), "w_out": w_out_p, "b_out": b_out_p}
    return prep, out_dim


@functools.partial(jax.jit, static_argnames=("out_dim",))
def custom_gnn_forward(feature_data, edge_index, edge_weights, prep, *, out_dim):
    """feature_data: [N, input_dims+1] f32
       edge_index:   [2, E] int32 (row 0 = src, row 1 = dst)
       edge_weights: [E] f32
       prep:         output of prepare_params (pre-transposed / padded weights)."""
    x = jnp.asarray(feature_data, jnp.float32)
    N, F = x.shape
    F_pad = prep["w_self"].shape[0]
    O_pad = prep["w_out"].shape[1]

    tm, tk = _choose_tiles(N)
    N_pad = _round_up(N, tk)          # tk is a multiple of tm -> divides both axes

    # Single padded bf16 copy of x (self path upcasts to f32 inside the kernel).
    x_bf16 = jnp.zeros((N_pad, F_pad), jnp.bfloat16).at[:N, :F].set(
        x.astype(jnp.bfloat16))

    # Dense weighted adjacency A[dst, src] (== PyG scatter-add), scattered
    # straight into a padded bf16 buffer (no f32 intermediate -> 1x HBM write).
    # Note: duplicate (dst,src) edges accumulate in bf16.
    # TODO(synk): swap for a CSR gather (scalar-prefetch row ptrs / col idx) at
    # large N; the dense tiles move O(N^2) bytes for O(N) real edges.
    src = edge_index[0]
    dst = edge_index[1]
    adj = (jnp.zeros((N_pad, N_pad), jnp.bfloat16)
           .at[dst, src].add(jnp.asarray(edge_weights, jnp.bfloat16)))

    # Keep the whole x resident in VMEM when small (kills the x_src re-stream).
    resident = (N_pad * F_pad * 2) <= _X_RESIDENT_BYTES

    hidden_flat = []
    for w_h, b_h in prep["hidden"]:
        hidden_flat += [w_h, b_h]
    num_hidden = len(prep["hidden"])

    weights = [prep["w_self"], prep["w_msg"], prep["b_in"],
               *hidden_flat, prep["w_out"], prep["b_out"]]

    grid = (N_pad // tm, N_pad // tk)

    if resident:
        xs_spec = pl.BlockSpec((N_pad, F_pad), lambda i, k: (0, 0))
    else:
        xs_spec = pl.BlockSpec((tk, F_pad), lambda i, k: (k, 0))

    in_specs = [
        pl.BlockSpec((tm, tk), lambda i, k: (i, k)),      # adj tile [dst, src]
        xs_spec,                                          # x (src rows / full)
        pl.BlockSpec((tm, F_pad), lambda i, k: (i, 0)),   # x (dst rows)
    ] + [pl.BlockSpec(w.shape, lambda i, k: (0, 0)) for w in weights]

    out_padded = pl.pallas_call(
        make_gnn_kernel(num_hidden, resident=resident, tk=tk),
        out_shape=jax.ShapeDtypeStruct((N_pad, O_pad), jnp.float32),
        grid_spec=pltpu.PrefetchScalarGridSpec(
            num_scalar_prefetch=0,
            grid=grid,
            in_specs=in_specs,
            out_specs=pl.BlockSpec((tm, O_pad), lambda i, k: (i, 0)),
            scratch_shapes=[pltpu.VMEM((tm, F_pad), jnp.float32)]),
        compiler_params=pltpu.CompilerParams(
            dimension_semantics=("parallel", "arbitrary"),
            # 32 MiB is safe on v7x (64 MiB physical); v5e/v6e could raise this
            # toward 64 MiB for even larger adj tiles.
            vmem_limit_bytes=32 * 1024 * 1024),
    )(adj, x_bf16, x_bf16, *weights)

    # Padded dst rows pick up ELU(bias) values in the head; slice them off.
    return out_padded[:N, :out_dim]


def reference_forward(feature_data, edge_index, edge_weights, params):
    """Pure-JAX f32 reference mirroring the PyTorch module exactly."""
    x = jnp.asarray(feature_data, jnp.float32)
    N = x.shape[0]
    src, dst = edge_index[0], edge_index[1]
    adj = jnp.zeros((N, N), jnp.float32).at[dst, src].add(
        jnp.asarray(edge_weights, jnp.float32))
    msg = adj @ x
    h = jnp.concatenate([x, msg], axis=1)
    h = h @ params["w_in"].T + params["b_in"]
    h = jax.nn.elu(h)
    for w_h, b_h in params["hidden"]:
        h = jax.nn.elu(h @ w_h.T + b_h)
    return h @ params["w_out"].T + params["b_out"]


def init_params(key, input_dims, hidden_dims, output_dims):
    """Deterministic synthetic parameters with the shapes CustomGNN creates."""
    F = input_dims + 1
    dims = list(hidden_dims)
    ks = jax.random.split(key, 2 * (len(dims) + 1))
    ki = iter(range(len(ks)))

    def lin(k_w, k_b, fan_out, fan_in):
        bound = 1.0 / jnp.sqrt(jnp.float32(fan_in))
        w = jax.random.uniform(k_w, (fan_out, fan_in), jnp.float32, -bound, bound)
        b = jax.random.uniform(k_b, (fan_out,), jnp.float32, -bound, bound)
        return w, b

    # input_layer.lin_rel : Linear((input_dims+1)*2, hidden_dims[0])
    w_in, b_in = lin(ks[next(ki)], ks[next(ki)], dims[0], 2 * F)
    # hidden_layers[i] : Linear(hidden_dims[i], hidden_dims[i+1])
    hidden = []
    for i in range(len(dims) - 1):
        hidden.append(lin(ks[next(ki)], ks[next(ki)], dims[i + 1], dims[i]))
    # output_layer : Linear(hidden_dims[-1], output_dims + 2)
    w_out, b_out = lin(ks[next(ki)], ks[next(ki)], output_dims + 2, dims[-1])
    return {"w_in": w_in, "b_in": b_in, "hidden": hidden,
            "w_out": w_out, "b_out": b_out}


if __name__ == "__main__":
    input_dims = 3          # node features carry input_dims + 1 = 4 channels
    hidden_dims = [32, 32]  # one hidden Linear(32, 32)
    output_dims = 6         # output layer emits output_dims + 2 = 8
    N = 384                 # > one dst tile so the (parallel, arbitrary) grid is exercised

    key = jax.random.PRNGKey(0)
    k_x, k_w, k_p = jax.random.split(key, 3)

    feature_data = jax.random.normal(k_x, (N, input_dims + 1), jnp.float32)

    # ring graph (both directions) plus a 7-hop edge into each node: 3N edges
    idx = jnp.arange(N, dtype=jnp.int32)
    src = jnp.concatenate([idx, (idx + 1) % N, (idx + 7) % N])
    dst = jnp.concatenate([(idx + 1) % N, idx, idx])
    edge_index = jnp.stack([src, dst], axis=0)                 # [2, 3N]
    edge_weights = jax.random.uniform(k_w, (3 * N,), jnp.float32, 0.1, 1.0)

    params = init_params(k_p, input_dims, hidden_dims, output_dims)
    prep, out_dim = prepare_params(params, input_dims + 1)     # one-time weight prep

    out = custom_gnn_forward(feature_data, edge_index, edge_weights, prep,
                             out_dim=out_dim)
    out = jax.block_until_ready(out)

    ref = reference_forward(feature_data, edge_index, edge_weights, params)
    assert out.shape == (N, output_dims + 2)
    max_err = float(jnp.max(jnp.abs(out - ref)))
    # adj, x (both paths) run in bf16 (f32 accumulation) -> bf16-level tolerance
    assert jnp.allclose(out, ref, atol=5e-2, rtol=5e-2), \
        f"mismatch vs reference: max abs err {max_err}"
    print("KERNEL_OK")
</pallas_src>

<mosaic_0001>
module attributes {stable_mosaic.version = 11 : i64} {
  func.func @kernel(%arg0: i32, %arg1: i32, %arg2: memref<256x512xbf16, #tpu.memory_space<vmem>>, %arg3: memref<512x128xbf16, #tpu.memory_space<vmem>>, %arg4: memref<256x128xbf16, #tpu.memory_space<vmem>>, %arg5: memref<128x128xf32, #tpu.memory_space<vmem>>, %arg6: memref<128x128xf32, #tpu.memory_space<vmem>>, %arg7: memref<1x128xf32, #tpu.memory_space<vmem>>, %arg8: memref<128x128xf32, #tpu.memory_space<vmem>>, %arg9: memref<1x128xf32, #tpu.memory_space<vmem>>, %arg10: memref<128x128xf32, #tpu.memory_space<vmem>>, %arg11: memref<1x128xf32, #tpu.memory_space<vmem>>, %arg12: memref<256x128xf32, #tpu.memory_space<vmem>>, %arg13: memref<256x128xf32, #tpu.memory_space<vmem>>) attributes {dimension_semantics = [#tpu.dimension_semantics<parallel>, #tpu.dimension_semantics<arbitrary>], iteration_bounds = array<i64: 2, 1>, scalar_prefetch = 0 : i64, scratch_operands = 1 : i64, tpu.core_type = #tpu.core_type<tc>, window_params = [{transform_indices = @transform_0, window_bounds = array<i64: 256, 512>}, {pipeline_mode = #tpu.pipeline_mode<synchronous>, transform_indices = @transform_1, window_bounds = array<i64: 512, 128>}, {transform_indices = @transform_2, window_bounds = array<i64: 256, 128>}, {pipeline_mode = #tpu.pipeline_mode<synchronous>, transform_indices = @transform_3, window_bounds = array<i64: 128, 128>}, {pipeline_mode = #tpu.pipeline_mode<synchronous>, transform_indices = @transform_4, window_bounds = array<i64: 128, 128>}, {pipeline_mode = #tpu.pipeline_mode<synchronous>, transform_indices = @transform_5, window_bounds = array<i64: 1, 128>}, {pipeline_mode = #tpu.pipeline_mode<synchronous>, transform_indices = @transform_6, window_bounds = array<i64: 128, 128>}, {pipeline_mode = #tpu.pipeline_mode<synchronous>, transform_indices = @transform_7, window_bounds = array<i64: 1, 128>}, {pipeline_mode = #tpu.pipeline_mode<synchronous>, transform_indices = @transform_8, window_bounds = array<i64: 128, 128>}, {pipeline_mode = #tpu.pipeline_mode<synchronous>, transform_indices = @transform_9, window_bounds = array<i64: 1, 128>}, {transform_indices = @transform_10, window_bounds = array<i64: 256, 128>}]} {
    %c0_i32 = arith.constant 0 : i32
    %0 = arith.cmpi eq, %arg1, %c0_i32 : i32
    %1 = arith.extui %0 : i1 to i32
    %c0_i32_0 = arith.constant 0 : i32
    %2 = arith.cmpi ne, %1, %c0_i32_0 : i32
    scf.if %2 {
      %cst_9 = arith.constant 0.000000e+00 : f32
      %15 = vector.broadcast %cst_9 : f32 to vector<256x128xf32>
      %c0_10 = arith.constant 0 : index
      %c0_11 = arith.constant 0 : index
      %16 = vector.load %arg13[%c0_10, %c0_11] : memref<256x128xf32, #tpu.memory_space<vmem>>, vector<256x128xf32>
      tpu.vector_store %arg13[%c0_10, %c0_11], %15 {strides = array<i32>} : memref<256x128xf32, #tpu.memory_space<vmem>>, vector<256x128xf32>,
    } else {
    }
    %c512_i32 = arith.constant 512 : i32
    %3 = arith.muli %arg1, %c512_i32 : i32
    %4 = tpu.assume_multiple %3, 512 : i32
    %5 = arith.index_cast %4 : i32 to index
    %c0 = arith.constant 0 : index
    %6 = vector.load %arg3[%5, %c0] : memref<512x128xbf16, #tpu.memory_space<vmem>>, vector<512x128xbf16>
    %c0_1 = arith.constant 0 : index
    %c0_2 = arith.constant 0 : index
    %7 = vector.load %arg13[%c0_1, %c0_2] : memref<256x128xf32, #tpu.memory_space<vmem>>, vector<256x128xf32>
    %c0_3 = arith.constant 0 : index
    %c0_4 = arith.constant 0 : index
    %8 = vector.load %arg2[%c0_3, %c0_4] : memref<256x512xbf16, #tpu.memory_space<vmem>>, vector<256x512xbf16>
    %cst = arith.constant dense<0.000000e+00> : vector<256x128xf32>
    %9 = tpu.matmul %8, %6, %cst {dimension_numbers = #tpu.dot_dimension_numbers<[1], [0], [0], [1], [0, 0, 1, 1], [], []>} : vector<256x512xbf16>, vector<512x128xbf16>, vector<256x128xf32> -> vector<256x128xf32>
    %10 = arith.addf %7, %9 : vector<256x128xf32>
    %c0_5 = arith.constant 0 : index
    %c0_6 = arith.constant 0 : index
    %11 = vector.load %arg13[%c0_5, %c0_6] : memref<256x128xf32, #tpu.memory_space<vmem>>, vector<256x128xf32>
    tpu.vector_store %arg13[%c0_5, %c0_6], %10 {strides = array<i32>} : memref<256x128xf32, #tpu.memory_space<vmem>>, vector<256x128xf32>,
    %c0_i32_7 = arith.constant 0 : i32
    %12 = arith.cmpi eq, %arg1, %c0_i32_7 : i32
    %13 = arith.extui %12 : i1 to i32
    %c0_i32_8 = arith.constant 0 : i32
    %14 = arith.cmpi ne, %13, %c0_i32_8 : i32
    scf.if %14 {
      %c0_9 = arith.constant 0 : index
      %c0_10 = arith.constant 0 : index
      %15 = vector.load %arg4[%c0_9, %c0_10] : memref<256x128xbf16, #tpu.memory_space<vmem>>, vector<256x128xbf16>
      %16 = arith.extf %15 : vector<256x128xbf16> to vector<256x128xf32>
      %c0_11 = arith.constant 0 : index
      %c0_12 = arith.constant 0 : index
      %17 = vector.load %arg5[%c0_11, %c0_12] : memref<128x128xf32, #tpu.memory_space<vmem>>, vector<128x128xf32>
      %cst_13 = arith.constant dense<0.000000e+00> : vector<256x128xf32>
      %18 = tpu.matmul %16, %17, %cst_13 {dimension_numbers = #tpu.dot_dimension_numbers<[1], [0], [0], [1], [0, 0, 1, 1], [], []>} : vector<256x128xf32>, vector<128x128xf32>, vector<256x128xf32> -> vector<256x128xf32>
      %c0_14 = arith.constant 0 : index
      %c0_15 = arith.constant 0 : index
      %19 = vector.load %arg13[%c0_14, %c0_15] : memref<256x128xf32, #tpu.memory_space<vmem>>, vector<256x128xf32>
      %c0_16 = arith.constant 0 : index
      %c0_17 = arith.constant 0 : index
      %20 = vector.load %arg6[%c0_16, %c0_17] : memref<128x128xf32, #tpu.memory_space<vmem>>, vector<128x128xf32>
      %cst_18 = arith.constant dense<0.000000e+00> : vector<256x128xf32>
      %21 = tpu.matmul %19, %20, %cst_18 {dimension_numbers = #tpu.dot_dimension_numbers<[1], [0], [0], [1], [0, 0, 1, 1], [], []>} : vector<256x128xf32>, vector<128x128xf32>, vector<256x128xf32> -> vector<256x128xf32>
      %22 = arith.addf %18, %21 : vector<256x128xf32>
      %c0_19 = arith.constant 0 : index
      %c0_20 = arith.constant 0 : index
      %23 = vector.load %arg7[%c0_19, %c0_20] : memref<1x128xf32, #tpu.memory_space<vmem>>, vector<1x128xf32>
      %24 = vector.broadcast %23 : vector<1x128xf32> to vector<256x128xf32>
      %25 = arith.addf %22, %24 : vector<256x128xf32>
      %cst_21 = arith.constant 0.000000e+00 : f32
      %26 = vector.broadcast %cst_21 : f32 to vector<256x128xf32>
      %27 = arith.cmpf ogt, %25, %26 : vector<256x128xf32>
      %cst_22 = arith.constant 0.000000e+00 : f32
      %28 = vector.broadcast %cst_22 : f32 to vector<256x128xf32>
      %29 = arith.select %27, %28, %25 : vector<256x128xi1>, vector<256x128xf32>
      %30 = math.exp %29 : vector<256x128xf32>
      %cst_23 = arith.constant 1.000000e+00 : f32
      %31 = vector.broadcast %cst_23 : f32 to vector<256x128xf32>
      %32 = arith.subf %30, %31 : vector<256x128xf32>
      %cst_24 = arith.constant 0.000000e+00 : f32
      %33 = vector.broadcast %cst_24 : f32 to vector<256x128xf32>
      %34 = arith.cmpf ogt, %25, %33 : vector<256x128xf32>
      %35 = arith.select %34, %25, %32 : vector<256x128xi1>, vector<256x128xf32>
      %c0_25 = arith.constant 0 : index
      %c0_26 = arith.constant 0 : index
      %36 = vector.load %arg8[%c0_25, %c0_26] : memref<128x128xf32, #tpu.memory_space<vmem>>, vector<128x128xf32>
      %c0_27 = arith.constant 0 : index
      %c0_28 = arith.constant 0 : index
      %37 = vector.load %arg9[%c0_27, %c0_28] : memref<1x128xf32, #tpu.memory_space<vmem>>, vector<1x128xf32>
      %cst_29 = arith.constant dense<0.000000e+00> : vector<256x128xf32>
      %38 = tpu.matmul %35, %36, %cst_29 {dimension_numbers = #tpu.dot_dimension_numbers<[1], [0], [0], [1], [0, 0, 1, 1], [], []>} : vector<256x128xf32>, vector<128x128xf32>, vector<256x128xf32> -> vector<256x128xf32>
      %39 = vector.broadcast %37 : vector<1x128xf32> to vector<256x128xf32>
      %40 = arith.addf %38, %39 : vector<256x128xf32>
      %cst_30 = arith.constant 0.000000e+00 : f32
      %41 = vector.broadcast %cst_30 : f32 to vector<256x128xf32>
      %42 = arith.cmpf ogt, %40, %41 : vector<256x128xf32>
      %cst_31 = arith.constant 0.000000e+00 : f32
      %43 = vector.broadcast %cst_31 : f32 to vector<256x128xf32>
      %44 = arith.select %42, %43, %40 : vector<256x128xi1>, vector<256x128xf32>
      %45 = math.exp %44 : vector<256x128xf32>
      %cst_32 = arith.constant 1.000000e+00 : f32
      %46 = vector.broadcast %cst_32 : f32 to vector<256x128xf32>
      %47 = arith.subf %45, %46 : vector<256x128xf32>
      %cst_33 = arith.constant 0.000000e+00 : f32
      %48 = vector.broadcast %cst_33 : f32 to vector<256x128xf32>
      %49 = arith.cmpf ogt, %40, %48 : vector<256x128xf32>
      %50 = arith.select %49, %40, %47 : vector<256x128xi1>, vector<256x128xf32>
      %c0_34 = arith.constant 0 : index
      %c0_35 = arith.constant 0 : index
      %51 = vector.load %arg10[%c0_34, %c0_35] : memref<128x128xf32, #tpu.memory_space<vmem>>, vector<128x128xf32>
      %cst_36 = arith.constant dense<0.000000e+00> : vector<256x128xf32>
      %52 = tpu.matmul %50, %51, %cst_36 {dimension_numbers = #tpu.dot_dimension_numbers<[1], [0], [0], [1], [0, 0, 1, 1], [], []>} : vector<256x128xf32>, vector<128x128xf32>, vector<256x128xf32> -> vector<256x128xf32>
      %c0_37 = arith.constant 0 : index
      %c0_38 = arith.constant 0 : index
      %53 = vector.load %arg11[%c0_37, %c0_38] : memref<1x128xf32, #tpu.memory_space<vmem>>, vector<1x128xf32>
      %54 = vector.broadcast %53 : vector<1x128xf32> to vector<256x128xf32>
      %55 = arith.addf %52, %54 : vector<256x128xf32>
      %c0_39 = arith.constant 0 : index
      %c0_40 = arith.constant 0 : index
      %56 = vector.load %arg12[%c0_39, %c0_40] : memref<256x128xf32, #tpu.memory_space<vmem>>, vector<256x128xf32>
      tpu.vector_store %arg12[%c0_39, %c0_40], %55 {strides = array<i32>} : memref<256x128xf32, #tpu.memory_space<vmem>>, vector<256x128xf32>,
    } else {
    }
    return
  }
  func.func @transform_0(%arg0: i32, %arg1: i32) -> (i32, i32) {
    %c0_i32 = arith.constant 0 : i32
    return %arg0, %arg1 : i32, i32
  }
  func.func @transform_1(%arg0: i32, %arg1: i32) -> (i32, i32) {
    %c0_i32 = arith.constant 0 : i32
    %c0_i32_0 = arith.constant 0 : i32
    %c0_i32_1 = arith.constant 0 : i32
    return %c0_i32, %c0_i32_0 : i32, i32
  }
  func.func @transform_2(%arg0: i32, %arg1: i32) -> (i32, i32) {
    %c0_i32 = arith.constant 0 : i32
    %c0_i32_0 = arith.constant 0 : i32
    return %arg0, %c0_i32 : i32, i32
  }
  func.func @transform_3(%arg0: i32, %arg1: i32) -> (i32, i32) {
    %c0_i32 = arith.constant 0 : i32
    %c0_i32_0 = arith.constant 0 : i32
    %c0_i32_1 = arith.constant 0 : i32
    return %c0_i32, %c0_i32_0 : i32, i32
  }
  func.func @transform_4(%arg0: i32, %arg1: i32) -> (i32, i32) {
    %c0_i32 = arith.constant 0 : i32
    %c0_i32_0 = arith.constant 0 : i32
    %c0_i32_1 = arith.constant 0 : i32
    return %c0_i32, %c0_i32_0 : i32, i32
  }
  func.func @transform_5(%arg0: i32, %arg1: i32) -> (i32, i32) {
    %c0_i32 = arith.constant 0 : i32
    %c0_i32_0 = arith.constant 0 : i32
    %c0_i32_1 = arith.constant 0 : i32
    return %c0_i32, %c0_i32_0 : i32, i32
  }
  func.func @transform_6(%arg0: i32, %arg1: i32) -> (i32, i32) {
    %c0_i32 = arith.constant 0 : i32
    %c0_i32_0 = arith.constant 0 : i32
    %c0_i32_1 = arith.constant 0 : i32
    return %c0_i32, %c0_i32_0 : i32, i32
  }
  func.func @transform_7(%arg0: i32, %arg1: i32) -> (i32, i32) {
    %c0_i32 = arith.constant 0 : i32
    %c0_i32_0 = arith.constant 0 : i32
    %c0_i32_1 = arith.constant 0 : i32
    return %c0_i32, %c0_i32_0 : i32, i32
  }
  func.func @transform_8(%arg0: i32, %arg1: i32) -> (i32, i32) {
    %c0_i32 = arith.constant 0 : i32
    %c0_i32_0 = arith.constant 0 : i32
    %c0_i32_1 = arith.constant 0 : i32
    return %c0_i32, %c0_i32_0 : i32, i32
  }
  func.func @transform_9(%arg0: i32, %arg1: i32) -> (i32, i32) {
    %c0_i32 = arith.constant 0 : i32
    %c0_i32_0 = arith.constant 0 : i32
    %c0_i32_1 = arith.constant 0 : i32
    return %c0_i32, %c0_i32_0 : i32, i32
  }
  func.func @transform_10(%arg0: i32, %arg1: i32) -> (i32, i32) {
    %c0_i32 = arith.constant 0 : i32
    %c0_i32_0 = arith.constant 0 : i32
    return %arg0, %c0_i32 : i32, i32
  }
}

</mosaic_0001>

<llo_original>
// kernel: custom_gnn_forward.1
$region0: #{custom_gnn_forward.1}
  #allocation0 [shape = 'u32[]', space=smem, size = 0x4, offset = 0x4, fixed_abs, tag = 'smem constant byte address 0x4 - core index']
  #allocation1 [shape = 'u32[72,128]{1,0:T(1,128)}', space=vmem, size = 0x9000, scoped, tag = 'internal scratch']
  #allocation2 [shape = 'f32[256,128]{1,0:T(8,128)}', space=vmem, size = 0x20000, scoped, tag = 'scratch operand']
  %s0 = inlined_call_operand.vmem [shape: bf16[512,512], index: 0, kind: input, shape index: {}]
  %s1 = inlined_call_operand.vmem [shape: bf16[512,128], index: 1, kind: input, shape index: {}, may-alias: {1,2}]
  %s2 = inlined_call_operand.vmem [shape: bf16[512,128], index: 2, kind: input, shape index: {}, may-alias: {1,2}]
  %s3 = inlined_call_operand.vmem [shape: f32[128,128], index: 3, kind: input, shape index: {}]
  %s4 = inlined_call_operand.vmem [shape: f32[128,128], index: 4, kind: input, shape index: {}]
  %s5 = inlined_call_operand.vmem [shape: f32[1,128], index: 5, kind: input, shape index: {}]
  %s6 = inlined_call_operand.vmem [shape: f32[128,128], index: 6, kind: input, shape index: {}]
  %s7 = inlined_call_operand.vmem [shape: f32[1,128], index: 7, kind: input, shape index: {}]
  %s8 = inlined_call_operand.vmem [shape: f32[128,128], index: 8, kind: input, shape index: {}]
  %s9 = inlined_call_operand.vmem [shape: f32[1,128], index: 9, kind: input, shape index: {}]
  %s10 = inlined_call_operand.vmem [shape: f32[512,128], index: 10, kind: output, shape index: {}]
  %s11 = sld [smem:[#allocation0]]
  $region81: #{custom_gnn_forward.1} parent=0
    _
  %s13 = ssub.s32 1, %s11
  %s14 = scalar_select 0, %s13, %s11
  loop: start=0, step=1, limit=4
  $region2: #{custom_gnn_forward.1} parent=0 // loop_pre_header
    _
  $region3: #{custom_gnn_forward.1} parent=0 // loop_header
    %s16 = sphi 0, %s20
    %p17 = scmp.ge.s32.totalorder %s16, 4
    %s23 = sphi 0, %s35
    %s24 = sphi 0, %s31
    %s25 = sphi 0, %s23
    %s26 = sphi 0, %s24
    %s27 = sphi 0, %s25
    %s28 = sphi 0, %s26
    %s40 = sphi 0, %s42
    %s43 = sphi 0, %s40
    %s44 = sphi 0, %s43
    %s60 = sphi 0, %s44
    %s64 = sphi 0, %s64
    %s66 = sphi 0, %s64
    %s67 = sphi 0, %s66
    %s81 = sphi 0, %s67
    %s87 = sphi 0, %s89
    %s90 = sphi 0, %s87
    %s91 = sphi 0, %s90
    %s107 = sphi 0, %s91
    %s111 = sphi 0, %s111
    %s113 = sphi 0, %s111
    %s114 = sphi 0, %s113
    %s128 = sphi 0, %s114
    %s132 = sphi 0, %s132
    %s134 = sphi 0, %s132
    %s135 = sphi 0, %s134
    %s149 = sphi 0, %s135
    %s153 = sphi 0, %s153
    %s155 = sphi 0, %s153
    %s156 = sphi 0, %s155
    %s170 = sphi 0, %s156
    %s174 = sphi 0, %s174
    %s176 = sphi 0, %s174
    %s177 = sphi 0, %s176
    %s191 = sphi 0, %s177
    %s195 = sphi 0, %s195
    %s197 = sphi 0, %s195
    %s198 = sphi 0, %s197
    %s212 = sphi 0, %s198
    %s216 = sphi 0, %s216
    %s218 = sphi 0, %s216
    %s219 = sphi 0, %s218
    %s233 = sphi 0, %s219
    %s237 = sphi 0, %s237
    %s239 = sphi 0, %s237
    %s240 = sphi 0, %s239
    %s254 = sphi 0, %s240
    %s260 = sphi 0, %s262
    %s263 = sphi 0, %s260
    %s264 = sphi 0, %s263
    %s280 = sphi 0, %s264
  $region4: #{custom_gnn_forward.1} parent=0 // loop_header_branch
    %19 = sbr.rel (%p17) target = $region8
  $region5: #{custom_gnn_forward.1} parent=0 // loop_body
    %s21 = ssub.s32 %s16, 1
    %s22 = ssub.s32 %s16, 2
    %s29 = sadd.s32 1, %s24
    %p30 = scmp.ge.s32.totalorder %s29, 1
    %s31 = scalar_select %p30, 0, %s29
    %s32 = sadd.s32 1, %s23
    %s33 = scalar_select %p30, %s32, %s23
    %p34 = scmp.ge.s32.totalorder %s33, 2
    %s35 = scalar_select %p34, 0, %s33
    %s36 = ssub.s32 %s23, %s35
    %s37 = ssub.s32 %s24, %s31
    %s38 = sor.u32 %s36, %s37
    %p39 = scmp.eq.s32.totalorder %s38, 0
    %s41 = sadd.s32 %s40, 1
    %s42 = scalar_select %p39, %s40, %s41
    %p45 = pneg %p39
    %p46 = scmp.eq.s32.totalorder %s16, 1
    %p47 = por %p45, %p46
    %p48 = scmp.ne.s32.totalorder %s40, %s43
    %p49 = scmp.eq.s32.totalorder %s16, 0
    %p50 = por %p48, %p49
    %p51 = scmp.ne.s32.totalorder %s40, %s43
    %p52 = scmp.eq.s32.totalorder %s21, 1
    %p53 = por %p51, %p52
    %p54 = scmp.ne.s32.totalorder %s43, %s44
    %p55 = scmp.eq.s32.totalorder %s21, 0
    %p56 = por %p54, %p55
    %p57 = scmp.ne.s32.totalorder %s43, %s44
    %p58 = scmp.eq.s32.totalorder %s22, 1
    %p59 = por %p57, %p58
    %p61 = scmp.ne.s32.totalorder %s44, %s60
    %p62 = scmp.eq.s32.totalorder %s22, 0
    %p63 = por %p61, %p62
    %s65 = sadd.s32 %s64, 1
    %p68 = scmp.eq.s32.totalorder %s16, 1
    %p69 = scmp.ne.s32.totalorder %s64, %s66
    %p70 = scmp.eq.s32.totalorder %s16, 0
    %p71 = por %p69, %p70
    %p72 = scmp.ne.s32.totalorder %s64, %s66
    %p73 = scmp.eq.s32.totalorder %s21, 1
    %p74 = por %p72, %p73
    %p75 = scmp.ne.s32.totalorder %s66, %s67
    %p76 = scmp.eq.s32.totalorder %s21, 0
    %p77 = por %p75, %p76
    %p78 = scmp.ne.s32.totalorder %s66, %s67
    %p79 = scmp.eq.s32.totalorder %s22, 1
    %p80 = por %p78, %p79
    %p82 = scmp.ne.s32.totalorder %s67, %s81
    %p83 = scmp.eq.s32.totalorder %s22, 0
    %p84 = por %p82, %p83
    %s85 = ssub.s32 %s23, %s35
    %p86 = scmp.eq.s32.totalorder %s85, 0
    %s88 = sadd.s32 %s87, 1
    %s89 = scalar_select %p86, %s87, %s88
    %p92 = pneg %p86
    %p93 = scmp.eq.s32.totalorder %s16, 1
    %p94 = por %p92, %p93
    %p95 = scmp.ne.s32.totalorder %s87, %s90
    %p96 = scmp.eq.s32.totalorder %s16, 0
    %p97 = por %p95, %p96
    %p98 = scmp.ne.s32.totalorder %s87, %s90
    %p99 = scmp.eq.s32.totalorder %s21, 1
    %p100 = por %p98, %p99
    %p101 = scmp.ne.s32.totalorder %s90, %s91
    %p102 = scmp.eq.s32.totalorder %s21, 0
    %p103 = por %p101, %p102
    %p104 = scmp.ne.s32.totalorder %s90, %s91
    %p105 = scmp.eq.s32.totalorder %s22, 1
    %p106 = por %p104, %p105
    %p108 = scmp.ne.s32.totalorder %s91, %s107
    %p109 = scmp.eq.s32.totalorder %s22, 0
    %p110 = por %p108, %p109
    %s112 = sadd.s32 %s111, 1
    %p115 = scmp.eq.s32.totalorder %s16, 1
    %p116 = scmp.ne.s32.totalorder %s111, %s113
    %p117 = scmp.eq.s32.totalorder %s16, 0
    %p118 = por %p116, %p117
    %p119 = scmp.ne.s32.totalorder %s111, %s113
    %p120 = scmp.eq.s32.totalorder %s21, 1
    %p121 = por %p119, %p120
    %p122 = scmp.ne.s32.totalorder %s113, %s114
    %p123 = scmp.eq.s32.totalorder %s21, 0
    %p124 = por %p122, %p123
    %p125 = scmp.ne.s32.totalorder %s113, %s114
    %p126 = scmp.eq.s32.totalorder %s22, 1
    %p127 = por %p125, %p126
    %p129 = scmp.ne.s32.totalorder %s114, %s128
    %p130 = scmp.eq.s32.totalorder %s22, 0
    %p131 = por %p129, %p130
    %s133 = sadd.s32 %s132, 1
    %p136 = scmp.eq.s32.totalorder %s16, 1
    %p137 = scmp.ne.s32.totalorder %s132, %s134
    %p138 = scmp.eq.s32.totalorder %s16, 0
    %p139 = por %p137, %p138
    %p140 = scmp.ne.s32.totalorder %s132, %s134
    %p141 = scmp.eq.s32.totalorder %s21, 1
    %p142 = por %p140, %p141
    %p143 = scmp.ne.s32.totalorder %s134, %s135
    %p144 = scmp.eq.s32.totalorder %s21, 0
    %p145 = por %p143, %p144
    %p146 = scmp.ne.s32.totalorder %s134, %s135
    %p147 = scmp.eq.s32.totalorder %s22, 1
    %p148 = por %p146, %p147
    %p150 = scmp.ne.s32.totalorder %s135, %s149
    %p151 = scmp.eq.s32.totalorder %s22, 0
    %p152 = por %p150, %p151
    %s154 = sadd.s32 %s153, 1
    %p157 = scmp.eq.s32.totalorder %s16, 1
    %p158 = scmp.ne.s32.totalorder %s153, %s155
    %p159 = scmp.eq.s32.totalorder %s16, 0
    %p160 = por %p158, %p159
    %p161 = scmp.ne.s32.totalorder %s153, %s155
    %p162 = scmp.eq.s32.totalorder %s21, 1
    %p163 = por %p161, %p162
    %p164 = scmp.ne.s32.totalorder %s155, %s156
    %p165 = scmp.eq.s32.totalorder %s21, 0
    %p166 = por %p164, %p165
    %p167 = scmp.ne.s32.totalorder %s155, %s156
    %p168 = scmp.eq.s32.totalorder %s22, 1
    %p169 = por %p167, %p168
    %p171 = scmp.ne.s32.totalorder %s156, %s170
    %p172 = scmp.eq.s32.totalorder %s22, 0
    %p173 = por %p171, %p172
    %s175 = sadd.s32 %s174, 1
    %p178 = scmp.eq.s32.totalorder %s16, 1
    %p179 = scmp.ne.s32.totalorder %s174, %s176
    %p180 = scmp.eq.s32.totalorder %s16, 0
    %p181 = por %p179, %p180
    %p182 = scmp.ne.s32.totalorder %s174, %s176
    %p183 = scmp.eq.s32.totalorder %s21, 1
    %p184 = por %p182, %p183
    %p185 = scmp.ne.s32.totalorder %s176, %s177
    %p186 = scmp.eq.s32.totalorder %s21, 0
    %p187 = por %p185, %p186
    %p188 = scmp.ne.s32.totalorder %s176, %s177
    %p189 = scmp.eq.s32.totalorder %s22, 1
    %p190 = por %p188, %p189
    %p192 = scmp.ne.s32.totalorder %s177, %s191
    %p193 = scmp.eq.s32.totalorder %s22, 0
    %p194 = por %p192, %p193
    %s196 = sadd.s32 %s195, 1
    %p199 = scmp.eq.s32.totalorder %s16, 1
    %p200 = scmp.ne.s32.totalorder %s195, %s197
    %p201 = scmp.eq.s32.totalorder %s16, 0
    %p202 = por %p200, %p201
    %p203 = scmp.ne.s32.totalorder %s195, %s197
    %p204 = scmp.eq.s32.totalorder %s21, 1
    %p205 = por %p203, %p204
    %p206 = scmp.ne.s32.totalorder %s197, %s198
    %p207 = scmp.eq.s32.totalorder %s21, 0
    %p208 = por %p206, %p207
    %p209 = scmp.ne.s32.totalorder %s197, %s198
    %p210 = scmp.eq.s32.totalorder %s22, 1
    %p211 = por %p209, %p210
    %p213 = scmp.ne.s32.totalorder %s198, %s212
    %p214 = scmp.eq.s32.totalorder %s22, 0
    %p215 = por %p213, %p214
    %s217 = sadd.s32 %s216, 1
    %p220 = scmp.eq.s32.totalorder %s16, 1
    %p221 = scmp.ne.s32.totalorder %s216, %s218
    %p222 = scmp.eq.s32.totalorder %s16, 0
    %p223 = por %p221, %p222
    %p224 = scmp.ne.s32.totalorder %s216, %s218
    %p225 = scmp.eq.s32.totalorder %s21, 1
    %p226 = por %p224, %p225
    %p227 = scmp.ne.s32.totalorder %s218, %s219
    %p228 = scmp.eq.s32.totalorder %s21, 0
    %p229 = por %p227, %p228
    %p230 = scmp.ne.s32.totalorder %s218, %s219
    %p231 = scmp.eq.s32.totalorder %s22, 1
    %p232 = por %p230, %p231
    %p234 = scmp.ne.s32.totalorder %s219, %s233
    %p235 = scmp.eq.s32.totalorder %s22, 0
    %p236 = por %p234, %p235
    %s238 = sadd.s32 %s237, 1
    %p241 = scmp.eq.s32.totalorder %s16, 1
    %p242 = scmp.ne.s32.totalorder %s237, %s239
    %p243 = scmp.eq.s32.totalorder %s16, 0
    %p244 = por %p242, %p243
    %p245 = scmp.ne.s32.totalorder %s237, %s239
    %p246 = scmp.eq.s32.totalorder %s21, 1
    %p247 = por %p245, %p246
    %p248 = scmp.ne.s32.totalorder %s239, %s240
    %p249 = scmp.eq.s32.totalorder %s21, 0
    %p250 = por %p248, %p249
    %p251 = scmp.ne.s32.totalorder %s239, %s240
    %p252 = scmp.eq.s32.totalorder %s22, 1
    %p253 = por %p251, %p252
    %p255 = scmp.ne.s32.totalorder %s240, %s254
    %p256 = scmp.eq.s32.totalorder %s22, 0
    %p257 = por %p255, %p256
    %s258 = ssub.s32 %s23, %s35
    %p259 = scmp.eq.s32.totalorder %s258, 0
    %s261 = sadd.s32 %s260, 1
    %s262 = scalar_select %p259, %s260, %s261
    %p265 = pneg %p259
    %p266 = scmp.eq.s32.totalorder %s16, 1
    %p267 = por %p265, %p266
    %p268 = scmp.ne.s32.totalorder %s260, %s263
    %p269 = scmp.eq.s32.totalorder %s16, 0
    %p270 = por %p268, %p269
    %p271 = scmp.ne.s32.totalorder %s260, %s263
    %p272 = scmp.eq.s32.totalorder %s21, 1
    %p273 = por %p271, %p272
    %p274 = scmp.ne.s32.totalorder %s263, %s264
    %p275 = scmp.eq.s32.totalorder %s21, 0
    %p276 = por %p274, %p275
    %p277 = scmp.ne.s32.totalorder %s263, %s264
    %p278 = scmp.eq.s32.totalorder %s22, 1
    %p279 = por %p277, %p278
    %p281 = scmp.ne.s32.totalorder %s264, %s280
    %p282 = scmp.eq.s32.totalorder %s22, 0
    %p283 = por %p281, %p282
    %p284 = scmp.le.s32.totalorder 1, %s16
    %p285 = scmp.lt.s32.totalorder %s16, 3
    %p286 = pnand %p284, %p285
    %p287 = pneg %p286
    // Predicated region
    $region9: #{custom_gnn_forward.1} parent=5 // pred_check
      _
    $region10: #{custom_gnn_forward.1} parent=5 // pred_check_branch
      %289 = sbr.rel (%p286) target = $region12
    $region11: #{custom_gnn_forward.1} parent=5 // pred_region
      %s290 = ssub.s32 %s16, 1
      // Predicated region
      $region13: #{custom_gnn_forward.1} parent=11 // pred_check
        %p291 = pneg %p77
      $region14: #{custom_gnn_forward.1} parent=11 // pred_check_branch
        %293 = sbr.rel (%p291) target = $region16
      $region15: #{custom_gnn_forward.1} parent=11 // pred_region
        _
      $region16: #{custom_gnn_forward.1} parent=11 // pred_fallthru
        _
      // Predicated region
      $region17: #{custom_gnn_forward.1} parent=11 // pred_check
        %p294 = pneg %p124
      $region18: #{custom_gnn_forward.1} parent=11 // pred_check_branch
        %296 = sbr.rel (%p294) target = $region20
      $region19: #{custom_gnn_forward.1} parent=11 // pred_region
        _
      $region20: #{custom_gnn_forward.1} parent=11 // pred_fallthru
        _
      // Predicated region
      $region21: #{custom_gnn_forward.1} parent=11 // pred_check
        %p297 = pneg %p145
      $region22: #{custom_gnn_forward.1} parent=11 // pred_check_branch
        %299 = sbr.rel (%p297) target = $region24
      $region23: #{custom_gnn_forward.1} parent=11 // pred_region
        _
      $region24: #{custom_gnn_forward.1} parent=11 // pred_fallthru
        _
      // Predicated region
      $region25: #{custom_gnn_forward.1} parent=11 // pred_check
        %p300 = pneg %p166
      $region26: #{custom_gnn_forward.1} parent=11 // pred_check_branch
        %302 = sbr.rel (%p300) target = $region28
      $region27: #{custom_gnn_forward.1} parent=11 // pred_region
        _
      $region28: #{custom_gnn_forward.1} parent=11 // pred_fallthru
        _
      // Predicated region
      $region29: #{custom_gnn_forward.1} parent=11 // pred_check
        %p303 = pneg %p187
      $region30: #{custom_gnn_forward.1} parent=11 // pred_check_branch
        %305 = sbr.rel (%p303) target = $region32
      $region31: #{custom_gnn_forward.1} parent=11 // pred_region
        _
      $region32: #{custom_gnn_forward.1} parent=11 // pred_fallthru
        _
      // Predicated region
      $region33: #{custom_gnn_forward.1} parent=11 // pred_check
        %p306 = pneg %p208
      $region34: #{custom_gnn_forward.1} parent=11 // pred_check_branch
        %308 = sbr.rel (%p306) target = $region36
      $region35: #{custom_gnn_forward.1} parent=11 // pred_region
        _
      $region36: #{custom_gnn_forward.1} parent=11 // pred_fallthru
        _
      // Predicated region
      $region37: #{custom_gnn_forward.1} parent=11 // pred_check
        %p309 = pneg %p229
      $region38: #{custom_gnn_forward.1} parent=11 // pred_check_branch
        %311 = sbr.rel (%p309) target = $region40
      $region39: #{custom_gnn_forward.1} parent=11 // pred_region
        _
      $region40: #{custom_gnn_forward.1} parent=11 // pred_fallthru
        _
      // Predicated region
      $region41: #{custom_gnn_forward.1} parent=11 // pred_check
        %p312 = pneg %p250
      $region42: #{custom_gnn_forward.1} parent=11 // pred_check_branch
        %314 = sbr.rel (%p312) target = $region44
      $region43: #{custom_gnn_forward.1} parent=11 // pred_region
        _
      $region44: #{custom_gnn_forward.1} parent=11 // pred_fallthru
        _
    $region12: #{custom_gnn_forward.1} parent=5 // pred_fallthru
      _
    %p315 = scmp.lt.s32.totalorder %s16, 2
    // Predicated region
    $region45: #{custom_gnn_forward.1} parent=5 // pred_check
      %p316 = pneg %p315
    $region46: #{custom_gnn_forward.1} parent=5 // pred_check_branch
      %318 = sbr.rel (%p316) target = $region48
    $region47: #{custom_gnn_forward.1} parent=5 // pred_region
      // Predicated region
      $region49: #{custom_gnn_forward.1} parent=47 // pred_check
        %p319 = pneg %p50
      $region50: #{custom_gnn_forward.1} parent=47 // pred_check_branch
        %321 = sbr.rel (%p319) target = $region52
      $region51: #{custom_gnn_forward.1} parent=47 // pred_region
        %s322 = smul.u32 32, %s23
        %s323 = smul.u32 4, %s24
        %p324 = scmp.lt.s32.totalorder %s322, 63
        %s325 = scalar_select %p324, %s322, 63
        %p326 = scmp.lt.s32.totalorder %s323, 3
        %s327 = scalar_select %p326, %s323, 3
        %s328 = smul.addr %s325, 4
        %s329 = sadd.s32 %s327, %s328
        %s330 = smul.addr %s329, 4
        %s331 = scalar_lea.vmem %s0, %s330
        %s332 = smul.u32 32, %s23
        %s333 = smul.u32 4, %s24
      $region52: #{custom_gnn_forward.1} parent=47 // pred_fallthru
        _
      // Predicated region
      $region53: #{custom_gnn_forward.1} parent=47 // pred_check
        %p334 = pneg %p97
      $region54: #{custom_gnn_forward.1} parent=47 // pred_check_branch
        %336 = sbr.rel (%p334) target = $region56
      $region55: #{custom_gnn_forward.1} parent=47 // pred_region
        %s337 = smul.u32 32, %s23
        %p338 = scmp.lt.s32.totalorder %s337, 63
        %s339 = scalar_select %p338, %s337, 63
        %s340 = smul.addr %s339, 4
        %s341 = scalar_lea.vmem %s2, %s340
        %s342 = smul.u32 32, %s23
      $region56: #{custom_gnn_forward.1} parent=47 // pred_fallthru
        _
    $region48: #{custom_gnn_forward.1} parent=5 // pred_fallthru
      _
    %p343 = scmp.le.s32.totalorder 1, %s16
    %p344 = scmp.lt.s32.totalorder %s16, 3
    %p345 = pnand %p343, %p344
    %p346 = pneg %p345
    // Predicated region
    $region57: #{custom_gnn_forward.1} parent=5 // pred_check
      _
    $region58: #{custom_gnn_forward.1} parent=5 // pred_check_branch
      %348 = sbr.rel (%p345) target = $region60
    $region59: #{custom_gnn_forward.1} parent=5 // pred_region
      %s349 = ssub.s32 %s16, 1
      %s350 = smul.u32 32, %s25
      %s351 = smul.u32 4, %s26
      %p352 = scmp.lt.s32.totalorder %s350, 63
      %s353 = scalar_select %p352, %s350, 63
      %p354 = scmp.lt.s32.totalorder %s351, 3
      %s355 = scalar_select %p354, %s351, 3
      %s356 = smul.addr %s353, 4
      %s357 = sadd.s32 %s355, %s356
      %s358 = smul.addr %s357, 4
      %s359 = scalar_lea.vmem %s0, %s358
      %p360 = pneg %p56
      %p361 = pneg %p53
      %p362 = pneg %p77
      %p363 = pneg %p74
      %s364 = smul.u32 32, %s25
      %p365 = scmp.lt.s32.totalorder %s364, 63
      %s366 = scalar_select %p365, %s364, 63
      %s367 = smul.addr %s366, 4
      %s368 = scalar_lea.vmem %s2, %s367
      %p369 = pneg %p103
      %p370 = pneg %p100
      %p371 = pneg %p124
      %p372 = pneg %p121
      %p373 = pneg %p145
      %p374 = pneg %p142
      %p375 = pneg %p166
      %p376 = pneg %p163
      %p377 = pneg %p187
      %p378 = pneg %p184
      %p379 = pneg %p208
      %p380 = pneg %p205
      %p381 = pneg %p229
      %p382 = pneg %p226
      %p383 = pneg %p250
      %p384 = pneg %p247
      %p385 = pneg %p276
      %p386 = pneg %p273
      %s387 = smul.u32 32, %s25
      %p388 = scmp.lt.s32.totalorder %s387, 63
      %s389 = scalar_select %p388, %s387, 63
      %s390 = smul.addr %s389, 8
      %s391 = scalar_lea.vmem %s10, %s390
      %s392 = smul.u32 32, %s25
      %s393 = smul.u32 4, %s26
      %p394 = scmp.lt.s32.totalorder %s392, 63
      %s395 = scalar_select %p394, %s392, 63
      %p396 = scmp.lt.s32.totalorder %s393, 3
      %s397 = scalar_select %p396, %s393, 3
      %s398 = smul.addr %s395, 4
      %s399 = sadd.s32 %s397, %s398
      %s400 = smul.addr %s399, 4
      %s401 = scalar_lea.vmem %s0, %s400
      %s402 = smul.u32 32, %s25
      %s403 = smul.u32 4, %s26
      %s404 = smul.u32 32, %s25
      %p405 = scmp.lt.s32.totalorder %s404, 63
      %s406 = scalar_select %p405, %s404, 63
      %s407 = smul.addr %s406, 4
      %s408 = scalar_lea.vmem %s2, %s407
      %s409 = smul.u32 32, %s25
      %s410 = smul.u32 32, %s25
      %p411 = scmp.lt.s32.totalorder %s410, 63
      %s412 = scalar_select %p411, %s410, 63
      %s413 = smul.addr %s412, 8
      %s414 = scalar_lea.vmem %s10, %s413
      %s415 = smul.u32 32, %s25
      %p416 = scmp.eq.s32.totalorder %s26, 0
      // Predicated region
      $region61: #{custom_gnn_forward.1} parent=59 // pred_check
        %p417 = pneg %p416
      $region62: #{custom_gnn_forward.1} parent=59 // pred_check_branch
        %419 = sbr.rel (%p417) target = $region64
      $region63: #{custom_gnn_forward.1} parent=59 // pred_region
        %420 = vst [vmem:[#allocation2] sm:$0xff] 0.0
        %421 = vst [vmem:[#allocation2 + $0x8] sm:$0xff] 0.0
        %422 = vst [vmem:[#allocation2 + $0x10] sm:$0xff] 0.0
        %423 = vst [vmem:[#allocation2 + $0x18] sm:$0xff] 0.0
        %424 = vst [vmem:[#allocation2 + $0x20] sm:$0xff] 0.0
        %425 = vst [vmem:[#allocation2 + $0x28] sm:$0xff] 0.0
        %426 = vst [vmem:[#allocation2 + $0x30] sm:$0xff] 0.0
        %427 = vst [vmem:[#allocation2 + $0x38] sm:$0xff] 0.0
        %428 = vst [vmem:[#allocation2 + $0x40] sm:$0xff] 0.0
        %429 = vst [vmem:[#allocation2 + $0x48] sm:$0xff] 0.0
        %430 = vst [vmem:[#allocation2 + $0x50] sm:$0xff] 0.0
        %431 = vst [vmem:[#allocation2 + $0x58] sm:$0xff] 0.0
        %432 = vst [vmem:[#allocation2 + $0x60] sm:$0xff] 0.0
        %433 = vst [vmem:[#allocation2 + $0x68] sm:$0xff] 0.0
        %434 = vst [vmem:[#allocation2 + $0x70] sm:$0xff] 0.0
        %435 = vst [vmem:[#allocation2 + $0x78] sm:$0xff] 0.0
        %436 = vst [vmem:[#allocation2 + $0x80] sm:$0xff] 0.0
        %437 = vst [vmem:[#allocation2 + $0x88] sm:$0xff] 0.0
        %438 = vst [vmem:[#allocation2 + $0x90] sm:$0xff] 0.0
        %439 = vst [vmem:[#allocation2 + $0x98] sm:$0xff] 0.0
        %440 = vst [vmem:[#allocation2 + $0xa0] sm:$0xff] 0.0
        %441 = vst [vmem:[#allocation2 + $0xa8] sm:$0xff] 0.0
        %442 = vst [vmem:[#allocation2 + $0xb0] sm:$0xff] 0.0
        %443 = vst [vmem:[#allocation2 + $0xb8] sm:$0xff] 0.0
        %444 = vst [vmem:[#allocation2 + $0xc0] sm:$0xff] 0.0
        %445 = vst [vmem:[#allocation2 + $0xc8] sm:$0xff] 0.0
        %446 = vst [vmem:[#allocation2 + $0xd0] sm:$0xff] 0.0
        %447 = vst [vmem:[#allocation2 + $0xd8] sm:$0xff] 0.0
        %448 = vst [vmem:[#allocation2 + $0xe0] sm:$0xff] 0.0
        %449 = vst [vmem:[#allocation2 + $0xe8] sm:$0xff] 0.0
        %450 = vst [vmem:[#allocation2 + $0xf0] sm:$0xff] 0.0
        %451 = vst [vmem:[#allocation2 + $0xf8] sm:$0xff] 0.0
      $region64: #{custom_gnn_forward.1} parent=59 // pred_fallthru
        _
      %s452 = smul.u32 %s26, 512
      %s453 = sshra.s32 %s452, 3
      %s454 = sand.u32 %s452, 7
      %s455 = smul.addr %s453, 4
      %s456 = scalar_lea.vmem %s1, %s455
      %v457 = vld [vmem:[%s456] sm:$0xf]
      %v458 = vld [vmem:[%s456 + $0x4] sm:$0xf]
      %v459 = vld [vmem:[%s456 + $0x8] sm:$0xf]
      %v460 = vld [vmem:[%s456 + $0xc] sm:$0xf]
      %v461 = vld [vmem:[%s456 + $0x10] sm:$0xf]
      %v462 = vld [vmem:[%s456 + $0x14] sm:$0xf]
      %v463 = vld [vmem:[%s456 + $0x18] sm:$0xf]
      %v464 = vld [vmem:[%s456 + $0x1c] sm:$0xf]
      %v465 = vld [vmem:[%s456 + $0x20] sm:$0xf]
      %v466 = vld [vmem:[%s456 + $0x24] sm:$0xf]
      %v467 = vld [vmem:[%s456 + $0x28] sm:$0xf]
      %v468 = vld [vmem:[%s456 + $0x2c] sm:$0xf]
      %v469 = vld [vmem:[%s456 + $0x30] sm:$0xf]
      %v470 = vld [vmem:[%s456 + $0x34] sm:$0xf]
      %v471 = vld [vmem:[%s456 + $0x38] sm:$0xf]
      %v472 = vld [vmem:[%s456 + $0x3c] sm:$0xf]
      %v473 = vld [vmem:[%s456 + $0x40] sm:$0xf]
      %v474 = vld [vmem:[%s456 + $0x44] sm:$0xf]
      %v475 = vld [vmem:[%s456 + $0x48] sm:$0xf]
      %v476 = vld [vmem:[%s456 + $0x4c] sm:$0xf]
      %v477 = vld [vmem:[%s456 + $0x50] sm:$0xf]
      %v478 = vld [vmem:[%s456 + $0x54] sm:$0xf]
      %v479 = vld [vmem:[%s456 + $0x58] sm:$0xf]
      %v480 = vld [vmem:[%s456 + $0x5c] sm:$0xf]
      %v481 = vld [vmem:[%s456 + $0x60] sm:$0xf]
      %v482 = vld [vmem:[%s456 + $0x64] sm:$0xf]
      %v483 = vld [vmem:[%s456 + $0x68] sm:$0xf]
      %v484 = vld [vmem:[%s456 + $0x6c] sm:$0xf]
      %v485 = vld [vmem:[%s456 + $0x70] sm:$0xf]
      %v486 = vld [vmem:[%s456 + $0x74] sm:$0xf]
      %v487 = vld [vmem:[%s456 + $0x78] sm:$0xf]
      %v488 = vld [vmem:[%s456 + $0x7c] sm:$0xf]
      %v489 = vld [vmem:[%s456 + $0x80] sm:$0xf]
      %v490 = vld [vmem:[%s456 + $0x84] sm:$0xf]
      %v491 = vld [vmem:[%s456 + $0x88] sm:$0xf]
      %v492 = vld [vmem:[%s456 + $0x8c] sm:$0xf]
      %v493 = vld [vmem:[%s456 + $0x90] sm:$0xf]
      %v494 = vld [vmem:[%s456 + $0x94] sm:$0xf]
      %v495 = vld [vmem:[%s456 + $0x98] sm:$0xf]
      %v496 = vld [vmem:[%s456 + $0x9c] sm:$0xf]
      %v497 = vld [vmem:[%s456 + $0xa0] sm:$0xf]
      %v498 = vld [vmem:[%s456 + $0xa4] sm:$0xf]
      %v499 = vld [vmem:[%s456 + $0xa8] sm:$0xf]
      %v500 = vld [vmem:[%s456 + $0xac] sm:$0xf]
      %v501 = vld [vmem:[%s456 + $0xb0] sm:$0xf]
      %v502 = vld [vmem:[%s456 + $0xb4] sm:$0xf]
      %v503 = vld [vmem:[%s456 + $0xb8] sm:$0xf]
      %v504 = vld [vmem:[%s456 + $0xbc] sm:$0xf]
      %v505 = vld [vmem:[%s456 + $0xc0] sm:$0xf]
      %v506 = vld [vmem:[%s456 + $0xc4] sm:$0xf]
      %v507 = vld [vmem:[%s456 + $0xc8] sm:$0xf]
      %v508 = vld [vmem:[%s456 + $0xcc] sm:$0xf]
      %v509 = vld [vmem:[%s456 + $0xd0] sm:$0xf]
      %v510 = vld [vmem:[%s456 + $0xd4] sm:$0xf]
      %v511 = vld [vmem:[%s456 + $0xd8] sm:$0xf]
      %v512 = vld [vmem:[%s456 + $0xdc] sm:$0xf]
      %v513 = vld [vmem:[%s456 + $0xe0] sm:$0xf]
      %v514 = vld [vmem:[%s456 + $0xe4] sm:$0xf]
      %v515 = vld [vmem:[%s456 + $0xe8] sm:$0xf]
      %v516 = vld [vmem:[%s456 + $0xec] sm:$0xf]
      %v517 = vld [vmem:[%s456 + $0xf0] sm:$0xf]
      %v518 = vld [vmem:[%s456 + $0xf4] sm:$0xf]
      %v519 = vld [vmem:[%s456 + $0xf8] sm:$0xf]
      %v520 = vld [vmem:[%s456 + $0xfc] sm:$0xf]
      %v521 = vld [vmem:[#allocation2] sm:$0xff]
      %v522 = vld [vmem:[#allocation2 + $0x8] sm:$0xff]
      %v523 = vld [vmem:[#allocation2 + $0x10] sm:$0xff]
      %v524 = vld [vmem:[#allocation2 + $0x18] sm:$0xff]
      %v525 = vld [vmem:[#allocation2 + $0x20] sm:$0xff]
      %v526 = vld [vmem:[#allocation2 + $0x28] sm:$0xff]
      %v527 = vld [vmem:[#allocation2 + $0x30] sm:$0xff]
      %v528 = vld [vmem:[#allocation2 + $0x38] sm:$0xff]
      %v529 = vld [vmem:[#allocation2 + $0x40] sm:$0xff]
      %v530 = vld [vmem:[#allocation2 + $0x48] sm:$0xff]
      %v531 = vld [vmem:[#allocation2 + $0x50] sm:$0xff]
      %v532 = vld [vmem:[#allocation2 + $0x58] sm:$0xff]
      %v533 = vld [vmem:[#allocation2 + $0x60] sm:$0xff]
      %v534 = vld [vmem:[#allocation2 + $0x68] sm:$0xff]
      %v535 = vld [vmem:[#allocation2 + $0x70] sm:$0xff]
      %v536 = vld [vmem:[#allocation2 + $0x78] sm:$0xff]
      %v537 = vld [vmem:[#allocation2 + $0x80] sm:$0xff]
      %v538 = vld [vmem:[#allocation2 + $0x88] sm:$0xff]
      %v539 = vld [vmem:[#allocation2 + $0x90] sm:$0xff]
      %v540 = vld [vmem:[#allocation2 + $0x98] sm:$0xff]
      %v541 = vld [vmem:[#allocation2 + $0xa0] sm:$0xff]
      %v542 = vld [vmem:[#allocation2 + $0xa8] sm:$0xff]
      %v543 = vld [vmem:[#allocation2 + $0xb0] sm:$0xff]
      %v544 = vld [vmem:[#allocation2 + $0xb8] sm:$0xff]
      %v545 = vld [vmem:[#allocation2 + $0xc0] sm:$0xff]
      %v546 = vld [vmem:[#allocation2 + $0xc8] sm:$0xff]
      %v547 = vld [vmem:[#allocation2 + $0xd0] sm:$0xff]
      %v548 = vld [vmem:[#allocation2 + $0xd8] sm:$0xff]
      %v549 = vld [vmem:[#allocation2 + $0xe0] sm:$0xff]
      %v550 = vld [vmem:[#allocation2 + $0xe8] sm:$0xff]
      %v551 = vld [vmem:[#allocation2 + $0xf0] sm:$0xff]
      %v552 = vld [vmem:[#allocation2 + $0xf8] sm:$0xff]
      %v553 = vld [vmem:[%s401] sm:$0xff]
      %v554 = vld [vmem:[%s401 + $0x8] sm:$0xff]
      %v555 = vld [vmem:[%s401 + $0x10] sm:$0xff]
      %v556 = vld [vmem:[%s401 + $0x18] sm:$0xff]
      %v557 = vld [vmem:[%s401 + $0x20] sm:$0xff]
      %v558 = vld [vmem:[%s401 + $0x28] sm:$0xff]
      %v559 = vld [vmem:[%s401 + $0x30] sm:$0xff]
      %v560 = vld [vmem:[%s401 + $0x38] sm:$0xff]
      %v561 = vld [vmem:[%s401 + $0x40] sm:$0xff]
      %v562 = vld [vmem:[%s401 + $0x48] sm:$0xff]
      %v563 = vld [vmem:[%s401 + $0x50] sm:$0xff]
      %v564 = vld [vmem:[%s401 + $0x58] sm:$0xff]
      %v565 = vld [vmem:[%s401 + $0x60] sm:$0xff]
      %v566 = vld [vmem:[%s401 + $0x68] sm:$0xff]
      %v567 = vld [vmem:[%s401 + $0x70] sm:$0xff]
      %v568 = vld [vmem:[%s401 + $0x78] sm:$0xff]
      %v569 = vld [vmem:[%s401 + $0x80] sm:$0xff]
      %v570 = vld [vmem:[%s401 + $0x88] sm:$0xff]
      %v571 = vld [vmem:[%s401 + $0x90] sm:$0xff]
      %v572 = vld [vmem:[%s401 + $0x98] sm:$0xff]
      %v573 = vld [vmem:[%s401 + $0xa0] sm:$0xff]
      %v574 = vld [vmem:[%s401 + $0xa8] sm:$0xff]
      %v575 = vld [vmem:[%s401 + $0xb0] sm:$0xff]
      %v576 = vld [vmem:[%s401 + $0xb8] sm:$0xff]
      %v577 = vld [vmem:[%s401 + $0xc0] sm:$0xff]
      %v578 = vld [vmem:[%s401 + $0xc8] sm:$0xff]
      %v579 = vld [vmem:[%s401 + $0xd0] sm:$0xff]
      %v580 = vld [vmem:[%s401 + $0xd8] sm:$0xff]
      %v581 = vld [vmem:[%s401 + $0xe0] sm:$0xff]
      %v582 = vld [vmem:[%s401 + $0xe8] sm:$0xff]
      %v583 = vld [vmem:[%s401 + $0xf0] sm:$0xff]
      %v584 = vld [vmem:[%s401 + $0xf8] sm:$0xff]
      %v585 = vld [vmem:[%s401 + $0x100] sm:$0xff]
      %v586 = vld [vmem:[%s401 + $0x108] sm:$0xff]
      %v587 = vld [vmem:[%s401 + $0x110] sm:$0xff]
      %v588 = vld [vmem:[%s401 + $0x118] sm:$0xff]
      %v589 = vld [vmem:[%s401 + $0x120] sm:$0xff]
      %v590 = vld [vmem:[%s401 + $0x128] sm:$0xff]
      %v591 = vld [vmem:[%s401 + $0x130] sm:$0xff]
      %v592 = vld [vmem:[%s401 + $0x138] sm:$0xff]
      %v593 = vld [vmem:[%s401 + $0x140] sm:$0xff]
      %v594 = vld [vmem:[%s401 + $0x148] sm:$0xff]
      %v595 = vld [vmem:[%s401 + $0x150] sm:$0xff]
      %v596 = vld [vmem:[%s401 + $0x158] sm:$0xff]
      %v597 = vld [vmem:[%s401 + $0x160] sm:$0xff]
      %v598 = vld [vmem:[%s401 + $0x168] sm:$0xff]
      %v599 = vld [vmem:[%s401 + $0x170] sm:$0xff]
      %v600 = vld [vmem:[%s401 + $0x178] sm:$0xff]
      %v601 = vld [vmem:[%s401 + $0x180] sm:$0xff]
      %v602 = vld [vmem:[%s401 + $0x188] sm:$0xff]
      %v603 = vld [vmem:[%s401 + $0x190] sm:$0xff]
      %v604 = vld [vmem:[%s401 + $0x198] sm:$0xff]
      %v605 = vld [vmem:[%s401 + $0x1a0] sm:$0xff]
      %v606 = vld [vmem:[%s401 + $0x1a8] sm:$0xff]
      %v607 = vld [vmem:[%s401 + $0x1b0] sm:$0xff]
      %v608 = vld [vmem:[%s401 + $0x1b8] sm:$0xff]
      %v609 = vld [vmem:[%s401 + $0x1c0] sm:$0xff]
      %v610 = vld [vmem:[%s401 + $0x1c8] sm:$0xff]
      %v611 = vld [vmem:[%s401 + $0x1d0] sm:$0xff]
      %v612 = vld [vmem:[%s401 + $0x1d8] sm:$0xff]
      %v613 = vld [vmem:[%s401 + $0x1e0] sm:$0xff]
      %v614 = vld [vmem:[%s401 + $0x1e8] sm:$0xff]
      %v615 = vld [vmem:[%s401 + $0x1f0] sm:$0xff]
      %v616 = vld [vmem:[%s401 + $0x1f8] sm:$0xff]
      %v681 = vunpack.c.l.b16 %v553
      %v682 = vunpack.c.h.b16 %v553
      %v683 = vunpack.c.l.b16 %v554
      %v684 = vunpack.c.h.b16 %v554
      %v685 = vunpack.c.l.b16 %v555
      %v686 = vunpack.c.h.b16 %v555
      %v687 = vunpack.c.l.b16 %v556
      %v688 = vunpack.c.h.b16 %v556
      %v689 = vunpack.c.l.b16 %v557
      %v690 = vunpack.c.h.b16 %v557
      %v691 = vunpack.c.l.b16 %v558
      %v692 = vunpack.c.h.b16 %v558
      %v693 = vunpack.c.l.b16 %v559
      %v694 = vunpack.c.h.b16 %v559
      %v695 = vunpack.c.l.b16 %v560
      %v696 = vunpack.c.h.b16 %v560
      %v697 = vunpack.c.l.b16 %v561
      %v698 = vunpack.c.h.b16 %v561
      %v699 = vunpack.c.l.b16 %v562
      %v700 = vunpack.c.h.b16 %v562
      %v701 = vunpack.c.l.b16 %v563
      %v702 = vunpack.c.h.b16 %v563
      %v703 = vunpack.c.l.b16 %v564
      %v704 = vunpack.c.h.b16 %v564
      %v705 = vunpack.c.l.b16 %v565
      %v706 = vunpack.c.h.b16 %v565
      %v707 = vunpack.c.l.b16 %v566
      %v708 = vunpack.c.h.b16 %v566
      %v709 = vunpack.c.l.b16 %v567
      %v710 = vunpack.c.h.b16 %v567
      %v711 = vunpack.c.l.b16 %v568
      %v712 = vunpack.c.h.b16 %v568
      %v713 = vunpack.c.l.b16 %v569
      %v714 = vunpack.c.h.b16 %v569
      %v715 = vunpack.c.l.b16 %v570
      %v716 = vunpack.c.h.b16 %v570
      %v717 = vunpack.c.l.b16 %v571
      %v718 = vunpack.c.h.b16 %v571
      %v719 = vunpack.c.l.b16 %v572
      %v720 = vunpack.c.h.b16 %v572
      %v721 = vunpack.c.l.b16 %v573
      %v722 = vunpack.c.h.b16 %v573
      %v723 = vunpack.c.l.b16 %v574
      %v724 = vunpack.c.h.b16 %v574
      %v725 = vunpack.c.l.b16 %v575
      %v726 = vunpack.c.h.b16 %v575
      %v727 = vunpack.c.l.b16 %v576
      %v728 = vunpack.c.h.b16 %v576
      %v729 = vunpack.c.l.b16 %v577
      %v730 = vunpack.c.h.b16 %v577
      %v731 = vunpack.c.l.b16 %v578
      %v732 = vunpack.c.h.b16 %v578
      %v733 = vunpack.c.l.b16 %v579
      %v734 = vunpack.c.h.b16 %v579
      %v735 = vunpack.c.l.b16 %v580
      %v736 = vunpack.c.h.b16 %v580
      %v737 = vunpack.c.l.b16 %v581
      %v738 = vunpack.c.h.b16 %v581
      %v739 = vunpack.c.l.b16 %v582
      %v740 = vunpack.c.h.b16 %v582
      %v741 = vunpack.c.l.b16 %v583
      %v742 = vunpack.c.h.b16 %v583
      %v743 = vunpack.c.l.b16 %v584
      %v744 = vunpack.c.h.b16 %v584
      %v745 = vunpack.c.l.b16 %v585
      %v746 = vunpack.c.h.b16 %v585
      %v747 = vunpack.c.l.b16 %v586
      %v748 = vunpack.c.h.b16 %v586
      %v749 = vunpack.c.l.b16 %v587
      %v750 = vunpack.c.h.b16 %v587
      %v751 = vunpack.c.l.b16 %v588
      %v752 = vunpack.c.h.b16 %v588
      %v753 = vunpack.c.l.b16 %v589
      %v754 = vunpack.c.h.b16 %v589
      %v755 = vunpack.c.l.b16 %v590
      %v756 = vunpack.c.h.b16 %v590
      %v757 = vunpack.c.l.b16 %v591
      %v758 = vunpack.c.h.b16 %v591
      %v759 = vunpack.c.l.b16 %v592
      %v760 = vunpack.c.h.b16 %v592
      %v761 = vunpack.c.l.b16 %v593
      %v762 = vunpack.c.h.b16 %v593
      %v763 = vunpack.c.l.b16 %v594
      %v764 = vunpack.c.h.b16 %v594
      %v765 = vunpack.c.l.b16 %v595
      %v766 = vunpack.c.h.b16 %v595
      %v767 = vunpack.c.l.b16 %v596
      %v768 = vunpack.c.h.b16 %v596
      %v769 = vunpack.c.l.b16 %v597
      %v770 = vunpack.c.h.b16 %v597
      %v771 = vunpack.c.l.b16 %v598
      %v772 = vunpack.c.h.b16 %v598
      %v773 = vunpack.c.l.b16 %v599
      %v774 = vunpack.c.h.b16 %v599
      %v775 = vunpack.c.l.b16 %v600
      %v776 = vunpack.c.h.b16 %v600
      %v777 = vunpack.c.l.b16 %v601
      %v778 = vunpack.c.h.b16 %v601
      %v779 = vunpack.c.l.b16 %v602
      %v780 = vunpack.c.h.b16 %v602
      %v781 = vunpack.c.l.b16 %v603
      %v782 = vunpack.c.h.b16 %v603
      %v783 = vunpack.c.l.b16 %v604
      %v784 = vunpack.c.h.b16 %v604
      %v785 = vunpack.c.l.b16 %v605
      %v786 = vunpack.c.h.b16 %v605
      %v787 = vunpack.c.l.b16 %v606
      %v788 = vunpack.c.h.b16 %v606
      %v789 = vunpack.c.l.b16 %v607
      %v790 = vunpack.c.h.b16 %v607
      %v791 = vunpack.c.l.b16 %v608
      %v792 = vunpack.c.h.b16 %v608
      %v793 = vunpack.c.l.b16 %v609
      %v794 = vunpack.c.h.b16 %v609
      %v795 = vunpack.c.l.b16 %v610
      %v796 = vunpack.c.h.b16 %v610
      %v797 = vunpack.c.l.b16 %v611
      %v798 = vunpack.c.h.b16 %v611
      %v799 = vunpack.c.l.b16 %v612
      %v800 = vunpack.c.h.b16 %v612
      %v801 = vunpack.c.l.b16 %v613
      %v802 = vunpack.c.h.b16 %v613
      %v803 = vunpack.c.l.b16 %v614
      %v804 = vunpack.c.h.b16 %v614
      %v805 = vunpack.c.l.b16 %v615
      %v806 = vunpack.c.h.b16 %v615
      %v807 = vunpack.c.l.b16 %v616
      %v808 = vunpack.c.h.b16 %v616
      %v809 = vpack.c.b16 %v685, %v681
      %v810 = vpack.c.b16 %v686, %v682
      %v811 = vpack.c.b16 %v687, %v683
      %v812 = vpack.c.b16 %v688, %v684
      %v813 = vpack.c.b16 %v693, %v689
      %v814 = vpack.c.b16 %v694, %v690
      %v815 = vpack.c.b16 %v695, %v691
      %v816 = vpack.c.b16 %v696, %v692
      %v817 = vpack.c.b16 %v701, %v697
      %v818 = vpack.c.b16 %v702, %v698
      %v819 = vpack.c.b16 %v703, %v699
      %v820 = vpack.c.b16 %v704, %v700
      %v821 = vpack.c.b16 %v709, %v705
      %v822 = vpack.c.b16 %v710, %v706
      %v823 = vpack.c.b16 %v711, %v707
      %v824 = vpack.c.b16 %v712, %v708
      %v825 = vpack.c.b16 %v717, %v713
      %v826 = vpack.c.b16 %v718, %v714
      %v827 = vpack.c.b16 %v719, %v715
      %v828 = vpack.c.b16 %v720, %v716
      %v829 = vpack.c.b16 %v725, %v721
      %v830 = vpack.c.b16 %v726, %v722
      %v831 = vpack.c.b16 %v727, %v723
      %v832 = vpack.c.b16 %v728, %v724
      %v833 = vpack.c.b16 %v733, %v729
      %v834 = vpack.c.b16 %v734, %v730
      %v835 = vpack.c.b16 %v735, %v731
      %v836 = vpack.c.b16 %v736, %v732
      %v837 = vpack.c.b16 %v741, %v737
      %v838 = vpack.c.b16 %v742, %v738
      %v839 = vpack.c.b16 %v743, %v739
      %v840 = vpack.c.b16 %v744, %v740
      %v841 = vpack.c.b16 %v749, %v745
      %v842 = vpack.c.b16 %v750, %v746
      %v843 = vpack.c.b16 %v751, %v747
      %v844 = vpack.c.b16 %v752, %v748
      %v845 = vpack.c.b16 %v757, %v753
      %v846 = vpack.c.b16 %v758, %v754
      %v847 = vpack.c.b16 %v759, %v755
      %v848 = vpack.c.b16 %v760, %v756
      %v849 = vpack.c.b16 %v765, %v761
      %v850 = vpack.c.b16 %v766, %v762
      %v851 = vpack.c.b16 %v767, %v763
      %v852 = vpack.c.b16 %v768, %v764
      %v853 = vpack.c.b16 %v773, %v769
      %v854 = vpack.c.b16 %v774, %v770
      %v855 = vpack.c.b16 %v775, %v771
      %v856 = vpack.c.b16 %v776, %v772
      %v857 = vpack.c.b16 %v781, %v777
      %v858 = vpack.c.b16 %v782, %v778
      %v859 = vpack.c.b16 %v783, %v779
      %v860 = vpack.c.b16 %v784, %v780
      %v861 = vpack.c.b16 %v789, %v785
      %v862 = vpack.c.b16 %v790, %v786
      %v863 = vpack.c.b16 %v791, %v787
      %v864 = vpack.c.b16 %v792, %v788
      %v865 = vpack.c.b16 %v797, %v793
      %v866 = vpack.c.b16 %v798, %v794
      %v867 = vpack.c.b16 %v799, %v795
      %v868 = vpack.c.b16 %v800, %v796
      %v869 = vpack.c.b16 %v805, %v801
      %v870 = vpack.c.b16 %v806, %v802
      %v871 = vpack.c.b16 %v807, %v803
      %v872 = vpack.c.b16 %v808, %v804
      %v1001 = vunpack.c.l.b16 %v457
      %v1002 = vunpack.c.l.b16 %v458
      %v1003 = vunpack.c.l.b16 %v459
      %v1004 = vunpack.c.l.b16 %v460
      %v1005 = vunpack.c.l.b16 %v461
      %v1006 = vunpack.c.l.b16 %v462
      %v1007 = vunpack.c.l.b16 %v463
      %v1008 = vunpack.c.l.b16 %v464
      %v1009 = vunpack.c.l.b16 %v465
      %v1010 = vunpack.c.l.b16 %v466
      %v1011 = vunpack.c.l.b16 %v467
      %v1012 = vunpack.c.l.b16 %v468
      %v1013 = vunpack.c.l.b16 %v469
      %v1014 = vunpack.c.l.b16 %v470
      %v1015 = vunpack.c.l.b16 %v471
      %v1016 = vunpack.c.l.b16 %v472
      %v1017 = vunpack.c.l.b16 %v473
      %v1018 = vunpack.c.l.b16 %v474
      %v1019 = vunpack.c.l.b16 %v475
      %v1020 = vunpack.c.l.b16 %v476
      %v1021 = vunpack.c.l.b16 %v477
      %v1022 = vunpack.c.l.b16 %v478
      %v1023 = vunpack.c.l.b16 %v479
      %v1024 = vunpack.c.l.b16 %v480
      %v1025 = vunpack.c.l.b16 %v481
      %v1026 = vunpack.c.l.b16 %v482
      %v1027 = vunpack.c.l.b16 %v483
      %v1028 = vunpack.c.l.b16 %v484
      %v1029 = vunpack.c.l.b16 %v485
      %v1030 = vunpack.c.l.b16 %v486
      %v1031 = vunpack.c.l.b16 %v487
      %v1032 = vunpack.c.l.b16 %v488
      %v1033 = vunpack.c.l.b16 %v489
      %v1034 = vunpack.c.l.b16 %v490
      %v1035 = vunpack.c.l.b16 %v491
      %v1036 = vunpack.c.l.b16 %v492
      %v1037 = vunpack.c.l.b16 %v493
      %v1038 = vunpack.c.l.b16 %v494
      %v1039 = vunpack.c.l.b16 %v495
      %v1040 = vunpack.c.l.b16 %v496
      %v1041 = vunpack.c.l.b16 %v497
      %v1042 = vunpack.c.l.b16 %v498
      %v1043 = vunpack.c.l.b16 %v499
      %v1044 = vunpack.c.l.b16 %v500
      %v1045 = vunpack.c.l.b16 %v501
      %v1046 = vunpack.c.l.b16 %v502
      %v1047 = vunpack.c.l.b16 %v503
      %v1048 = vunpack.c.l.b16 %v504
      %v1049 = vunpack.c.l.b16 %v505
      %v1050 = vunpack.c.l.b16 %v506
      %v1051 = vunpack.c.l.b16 %v507
      %v1052 = vunpack.c.l.b16 %v508
      %v1053 = vunpack.c.l.b16 %v509
      %v1054 = vunpack.c.l.b16 %v510
      %v1055 = vunpack.c.l.b16 %v511
      %v1056 = vunpack.c.l.b16 %v512
      %v1057 = vunpack.c.l.b16 %v513
      %v1058 = vunpack.c.l.b16 %v514
      %v1059 = vunpack.c.l.b16 %v515
      %v1060 = vunpack.c.l.b16 %v516
      %v1061 = vunpack.c.l.b16 %v517
      %v1062 = vunpack.c.l.b16 %v518
      %v1063 = vunpack.c.l.b16 %v519
      %v1064 = vunpack.c.l.b16 %v520
      %v1065 = vpack.c.b16 %v1002, %v1001
      %v1066 = vpack.c.b16 %v1004, %v1003
      %v1067 = vpack.c.b16 %v1006, %v1005
      %v1068 = vpack.c.b16 %v1008, %v1007
      %v1069 = vpack.c.b16 %v1010, %v1009
      %v1070 = vpack.c.b16 %v1012, %v1011
      %v1071 = vpack.c.b16 %v1014, %v1013
      %v1072 = vpack.c.b16 %v1016, %v1015
      %v1073 = vpack.c.b16 %v1018, %v1017
      %v1074 = vpack.c.b16 %v1020, %v1019
      %v1075 = vpack.c.b16 %v1022, %v1021
      %v1076 = vpack.c.b16 %v1024, %v1023
      %v1077 = vpack.c.b16 %v1026, %v1025
      %v1078 = vpack.c.b16 %v1028, %v1027
      %v1079 = vpack.c.b16 %v1030, %v1029
      %v1080 = vpack.c.b16 %v1032, %v1031
      %v1081 = vpack.c.b16 %v1034, %v1033
      %v1082 = vpack.c.b16 %v1036, %v1035
      %v1083 = vpack.c.b16 %v1038, %v1037
      %v1084 = vpack.c.b16 %v1040, %v1039
      %v1085 = vpack.c.b16 %v1042, %v1041
      %v1086 = vpack.c.b16 %v1044, %v1043
      %v1087 = vpack.c.b16 %v1046, %v1045
      %v1088 = vpack.c.b16 %v1048, %v1047
      %v1089 = vpack.c.b16 %v1050, %v1049
      %v1090 = vpack.c.b16 %v1052, %v1051
      %v1091 = vpack.c.b16 %v1054, %v1053
      %v1092 = vpack.c.b16 %v1056, %v1055
      %v1093 = vpack.c.b16 %v1058, %v1057
      %v1094 = vpack.c.b16 %v1060, %v1059
      %v1095 = vpack.c.b16 %v1062, %v1061
      %v1096 = vpack.c.b16 %v1064, %v1063
      %1129 = vmatpush.bf16.msra.mxu0 %v1072
      %1130 = vmatpush.bf16.msra.mxu0 %v1071
      %1131 = vmatpush.bf16.msra.mxu0 %v1070
      %1132 = vmatpush.bf16.msra.mxu0 %v1069
      %1133 = vmatpush.bf16.msra.mxu0 %v1068
      %1134 = vmatpush.bf16.msra.mxu0 %v1067
      %1135 = vmatpush.bf16.msra.mxu0 %v1066
      %1136 = vmatpush.bf16.msra.mxu0 %v1065
      %1137 = vmatmul.bf16.gmra.mxu0 %v809
      %v1138 = vpop.f32.mrf.mxu0
      %v1139 = vadd.f32 0.0, %v1138
      %v1140 = vpop.f32.mrf.mxu0
      %v1141 = vadd.f32 0.0, %v1140
      %1142 = vmatmul.bf16.gmra.mxu0 %v813
      %v1143 = vpop.f32.mrf.mxu0
      %v1144 = vadd.f32 0.0, %v1143
      %v1145 = vpop.f32.mrf.mxu0
      %v1146 = vadd.f32 0.0, %v1145
      %1147 = vmatmul.bf16.gmra.mxu0 %v817
      %v1148 = vpop.f32.mrf.mxu0
      %v1149 = vadd.f32 0.0, %v1148
      %v1150 = vpop.f32.mrf.mxu0
      %v1151 = vadd.f32 0.0, %v1150
      %1152 = vmatmul.bf16.gmra.mxu0 %v821
      %v1153 = vpop.f32.mrf.mxu0
      %v1154 = vadd.f32 0.0, %v1153
      %v1155 = vpop.f32.mrf.mxu0
      %v1156 = vadd.f32 0.0, %v1155
      %1157 = vmatmul.bf16.gmra.mxu0 %v825
      %v1158 = vpop.f32.mrf.mxu0
      %v1159 = vadd.f32 0.0, %v1158
      %v1160 = vpop.f32.mrf.mxu0
      %v1161 = vadd.f32 0.0, %v1160
      %1162 = vmatmul.bf16.gmra.mxu0 %v829
      %v1163 = vpop.f32.mrf.mxu0
      %v1164 = vadd.f32 0.0, %v1163
      %v1165 = vpop.f32.mrf.mxu0
      %v1166 = vadd.f32 0.0, %v1165
      %1167 = vmatmul.bf16.gmra.mxu0 %v833
      %v1168 = vpop.f32.mrf.mxu0
      %v1169 = vadd.f32 0.0, %v1168
      %v1170 = vpop.f32.mrf.mxu0
      %v1171 = vadd.f32 0.0, %v1170
      %1172 = vmatmul.bf16.gmra.mxu0 %v837
      %v1173 = vpop.f32.mrf.mxu0
      %v1174 = vadd.f32 0.0, %v1173
      %v1175 = vpop.f32.mrf.mxu0
      %v1176 = vadd.f32 0.0, %v1175
      %1177 = vmatmul.bf16.gmra.mxu0 %v841
      %v1178 = vpop.f32.mrf.mxu0
      %v1179 = vadd.f32 0.0, %v1178
      %v1180 = vpop.f32.mrf.mxu0
      %v1181 = vadd.f32 0.0, %v1180
      %1182 = vmatmul.bf16.gmra.mxu0 %v845
      %v1183 = vpop.f32.mrf.mxu0
      %v1184 = vadd.f32 0.0, %v1183
      %v1185 = vpop.f32.mrf.mxu0
      %v1186 = vadd.f32 0.0, %v1185
      %1187 = vmatmul.bf16.gmra.mxu0 %v849
      %v1188 = vpop.f32.mrf.mxu0
      %v1189 = vadd.f32 0.0, %v1188
      %v1190 = vpop.f32.mrf.mxu0
      %v1191 = vadd.f32 0.0, %v1190
      %1192 = vmatmul.bf16.gmra.mxu0 %v853
      %v1193 = vpop.f32.mrf.mxu0
      %v1194 = vadd.f32 0.0, %v1193
      %v1195 = vpop.f32.mrf.mxu0
      %v1196 = vadd.f32 0.0, %v1195
      %1197 = vmatmul.bf16.gmra.mxu0 %v857
      %v1198 = vpop.f32.mrf.mxu0
      %v1199 = vadd.f32 0.0, %v1198
      %v1200 = vpop.f32.mrf.mxu0
      %v1201 = vadd.f32 0.0, %v1200
      %1202 = vmatmul.bf16.gmra.mxu0 %v861
      %v1203 = vpop.f32.mrf.mxu0
      %v1204 = vadd.f32 0.0, %v1203
      %v1205 = vpop.f32.mrf.mxu0
      %v1206 = vadd.f32 0.0, %v1205
      %1207 = vmatmul.bf16.gmra.mxu0 %v865
      %v1208 = vpop.f32.mrf.mxu0
      %v1209 = vadd.f32 0.0, %v1208
      %v1210 = vpop.f32.mrf.mxu0
      %v1211 = vadd.f32 0.0, %v1210
      %1212 = vmatmul.bf16.gmra.mxu0 %v869
      %v1213 = vpop.f32.mrf.mxu0
      %v1214 = vadd.f32 0.0, %v1213
      %v1215 = vpop.f32.mrf.mxu0
      %v1216 = vadd.f32 0.0, %v1215
      %1217 = vdwg.mxu0
      %1218 = vmatpush.bf16.msra.mxu0 %v1080
      %1219 = vmatpush.bf16.msra.mxu0 %v1079
      %1220 = vmatpush.bf16.msra.mxu0 %v1078
      %1221 = vmatpush.bf16.msra.mxu0 %v1077
      %1222 = vmatpush.bf16.msra.mxu0 %v1076
      %1223 = vmatpush.bf16.msra.mxu0 %v1075
      %1224 = vmatpush.bf16.msra.mxu0 %v1074
      %1225 = vmatpush.bf16.msra.mxu0 %v1073
      %1226 = vmatmul.bf16.gmra.mxu0 %v810
      %v1227 = vpop.f32.mrf.mxu0
      %v1228 = vadd.f32 %v1139, %v1227
      %v1229 = vpop.f32.mrf.mxu0
      %v1230 = vadd.f32 %v1141, %v1229
      %1231 = vmatmul.bf16.gmra.mxu0 %v814
      %v1232 = vpop.f32.mrf.mxu0
      %v1233 = vadd.f32 %v1144, %v1232
      %v1234 = vpop.f32.mrf.mxu0
      %v1235 = vadd.f32 %v1146, %v1234
      %1236 = vmatmul.bf16.gmra.mxu0 %v818
      %v1237 = vpop.f32.mrf.mxu0
      %v1238 = vadd.f32 %v1149, %v1237
      %v1239 = vpop.f32.mrf.mxu0
      %v1240 = vadd.f32 %v1151, %v1239
      %1241 = vmatmul.bf16.gmra.mxu0 %v822
      %v1242 = vpop.f32.mrf.mxu0
      %v1243 = vadd.f32 %v1154, %v1242
      %v1244 = vpop.f32.mrf.mxu0
      %v1245 = vadd.f32 %v1156, %v1244
      %1246 = vmatmul.bf16.gmra.mxu0 %v826
      %v1247 = vpop.f32.mrf.mxu0
      %v1248 = vadd.f32 %v1159, %v1247
      %v1249 = vpop.f32.mrf.mxu0
      %v1250 = vadd.f32 %v1161, %v1249
      %1251 = vmatmul.bf16.gmra.mxu0 %v830
      %v1252 = vpop.f32.mrf.mxu0
      %v1253 = vadd.f32 %v1164, %v1252
      %v1254 = vpop.f32.mrf.mxu0
      %v1255 = vadd.f32 %v1166, %v1254
      %1256 = vmatmul.bf16.gmra.mxu0 %v834
      %v1257 = vpop.f32.mrf.mxu0
      %v1258 = vadd.f32 %v1169, %v1257
      %v1259 = vpop.f32.mrf.mxu0
      %v1260 = vadd.f32 %v1171, %v1259
      %1261 = vmatmul.bf16.gmra.mxu0 %v838
      %v1262 = vpop.f32.mrf.mxu0
      %v1263 = vadd.f32 %v1174, %v1262
      %v1264 = vpop.f32.mrf.mxu0
      %v1265 = vadd.f32 %v1176, %v1264
      %1266 = vmatmul.bf16.gmra.mxu0 %v842
      %v1267 = vpop.f32.mrf.mxu0
      %v1268 = vadd.f32 %v1179, %v1267
      %v1269 = vpop.f32.mrf.mxu0
      %v1270 = vadd.f32 %v1181, %v1269
      %1271 = vmatmul.bf16.gmra.mxu0 %v846
      %v1272 = vpop.f32.mrf.mxu0
      %v1273 = vadd.f32 %v1184, %v1272
      %v1274 = vpop.f32.mrf.mxu0
      %v1275 = vadd.f32 %v1186, %v1274
      %1276 = vmatmul.bf16.gmra.mxu0 %v850
      %v1277 = vpop.f32.mrf.mxu0
      %v1278 = vadd.f32 %v1189, %v1277
      %v1279 = vpop.f32.mrf.mxu0
      %v1280 = vadd.f32 %v1191, %v1279
      %1281 = vmatmul.bf16.gmra.mxu0 %v854
      %v1282 = vpop.f32.mrf.mxu0
      %v1283 = vadd.f32 %v1194, %v1282
      %v1284 = vpop.f32.mrf.mxu0
      %v1285 = vadd.f32 %v1196, %v1284
      %1286 = vmatmul.bf16.gmra.mxu0 %v858
      %v1287 = vpop.f32.mrf.mxu0
      %v1288 = vadd.f32 %v1199, %v1287
      %v1289 = vpop.f32.mrf.mxu0
      %v1290 = vadd.f32 %v1201, %v1289
      %1291 = vmatmul.bf16.gmra.mxu0 %v862
      %v1292 = vpop.f32.mrf.mxu0
      %v1293 = vadd.f32 %v1204, %v1292
      %v1294 = vpop.f32.mrf.mxu0
      %v1295 = vadd.f32 %v1206, %v1294
      %1296 = vmatmul.bf16.gmra.mxu0 %v866
      %v1297 = vpop.f32.mrf.mxu0
      %v1298 = vadd.f32 %v1209, %v1297
      %v1299 = vpop.f32.mrf.mxu0
      %v1300 = vadd.f32 %v1211, %v1299
      %1301 = vmatmul.bf16.gmra.mxu0 %v870
      %v1302 = vpop.f32.mrf.mxu0
      %v1303 = vadd.f32 %v1214, %v1302
      %v1304 = vpop.f32.mrf.mxu0
      %v1305 = vadd.f32 %v1216, %v1304
      %1306 = vdwg.mxu0
      %1307 = vmatpush.bf16.msra.mxu0 %v1088
      %1308 = vmatpush.bf16.msra.mxu0 %v1087
      %1309 = vmatpush.bf16.msra.mxu0 %v1086
      %1310 = vmatpush.bf16.msra.mxu0 %v1085
      %1311 = vmatpush.bf16.msra.mxu0 %v1084
      %1312 = vmatpush.bf16.msra.mxu0 %v1083
      %1313 = vmatpush.bf16.msra.mxu0 %v1082
      %1314 = vmatpush.bf16.msra.mxu0 %v1081
      %1315 = vmatmul.bf16.gmra.mxu0 %v811
      %v1316 = vpop.f32.mrf.mxu0
      %v1317 = vadd.f32 %v1228, %v1316
      %v1318 = vpop.f32.mrf.mxu0
      %v1319 = vadd.f32 %v1230, %v1318
      %1320 = vmatmul.bf16.gmra.mxu0 %v815
      %v1321 = vpop.f32.mrf.mxu0
      %v1322 = vadd.f32 %v1233, %v1321
      %v1323 = vpop.f32.mrf.mxu0
      %v1324 = vadd.f32 %v1235, %v1323
      %1325 = vmatmul.bf16.gmra.mxu0 %v819
      %v1326 = vpop.f32.mrf.mxu0
      %v1327 = vadd.f32 %v1238, %v1326
      %v1328 = vpop.f32.mrf.mxu0
      %v1329 = vadd.f32 %v1240, %v1328
      %1330 = vmatmul.bf16.gmra.mxu0 %v823
      %v1331 = vpop.f32.mrf.mxu0
      %v1332 = vadd.f32 %v1243, %v1331
      %v1333 = vpop.f32.mrf.mxu0
      %v1334 = vadd.f32 %v1245, %v1333
      %1335 = vmatmul.bf16.gmra.mxu0 %v827
      %v1336 = vpop.f32.mrf.mxu0
      %v1337 = vadd.f32 %v1248, %v1336
      %v1338 = vpop.f32.mrf.mxu0
      %v1339 = vadd.f32 %v1250, %v1338
      %1340 = vmatmul.bf16.gmra.mxu0 %v831
      %v1341 = vpop.f32.mrf.mxu0
      %v1342 = vadd.f32 %v1253, %v1341
      %v1343 = vpop.f32.mrf.mxu0
      %v1344 = vadd.f32 %v1255, %v1343
      %1345 = vmatmul.bf16.gmra.mxu0 %v835
      %v1346 = vpop.f32.mrf.mxu0
      %v1347 = vadd.f32 %v1258, %v1346
      %v1348 = vpop.f32.mrf.mxu0
      %v1349 = vadd.f32 %v1260, %v1348
      %1350 = vmatmul.bf16.gmra.mxu0 %v839
      %v1351 = vpop.f32.mrf.mxu0
      %v1352 = vadd.f32 %v1263, %v1351
      %v1353 = vpop.f32.mrf.mxu0
      %v1354 = vadd.f32 %v1265, %v1353
      %1355 = vmatmul.bf16.gmra.mxu0 %v843
      %v1356 = vpop.f32.mrf.mxu0
      %v1357 = vadd.f32 %v1268, %v1356
      %v1358 = vpop.f32.mrf.mxu0
      %v1359 = vadd.f32 %v1270, %v1358
      %1360 = vmatmul.bf16.gmra.mxu0 %v847
      %v1361 = vpop.f32.mrf.mxu0
      %v1362 = vadd.f32 %v1273, %v1361
      %v1363 = vpop.f32.mrf.mxu0
      %v1364 = vadd.f32 %v1275, %v1363
      %1365 = vmatmul.bf16.gmra.mxu0 %v851
      %v1366 = vpop.f32.mrf.mxu0
      %v1367 = vadd.f32 %v1278, %v1366
      %v1368 = vpop.f32.mrf.mxu0
      %v1369 = vadd.f32 %v1280, %v1368
      %1370 = vmatmul.bf16.gmra.mxu0 %v855
      %v1371 = vpop.f32.mrf.mxu0
      %v1372 = vadd.f32 %v1283, %v1371
      %v1373 = vpop.f32.mrf.mxu0
      %v1374 = vadd.f32 %v1285, %v1373
      %1375 = vmatmul.bf16.gmra.mxu0 %v859
      %v1376 = vpop.f32.mrf.mxu0
      %v1377 = vadd.f32 %v1288, %v1376
      %v1378 = vpop.f32.mrf.mxu0
      %v1379 = vadd.f32 %v1290, %v1378
      %1380 = vmatmul.bf16.gmra.mxu0 %v863
      %v1381 = vpop.f32.mrf.mxu0
      %v1382 = vadd.f32 %v1293, %v1381
      %v1383 = vpop.f32.mrf.mxu0
      %v1384 = vadd.f32 %v1295, %v1383
      %1385 = vmatmul.bf16.gmra.mxu0 %v867
      %v1386 = vpop.f32.mrf.mxu0
      %v1387 = vadd.f32 %v1298, %v1386
      %v1388 = vpop.f32.mrf.mxu0
      %v1389 = vadd.f32 %v1300, %v1388
      %1390 = vmatmul.bf16.gmra.mxu0 %v871
      %v1391 = vpop.f32.mrf.mxu0
      %v1392 = vadd.f32 %v1303, %v1391
      %v1393 = vpop.f32.mrf.mxu0
      %v1394 = vadd.f32 %v1305, %v1393
      %1395 = vdwg.mxu0
      %1396 = vmatpush.bf16.msra.mxu0 %v1096
      %1397 = vmatpush.bf16.msra.mxu0 %v1095
      %1398 = vmatpush.bf16.msra.mxu0 %v1094
      %1399 = vmatpush.bf16.msra.mxu0 %v1093
      %1400 = vmatpush.bf16.msra.mxu0 %v1092
      %1401 = vmatpush.bf16.msra.mxu0 %v1091
      %1402 = vmatpush.bf16.msra.mxu0 %v1090
      %1403 = vmatpush.bf16.msra.mxu0 %v1089
      %1404 = vmatmul.bf16.gmra.mxu0 %v812
      %v1405 = vpop.f32.mrf.mxu0
      %v1406 = vadd.f32 %v1317, %v1405
      %v1407 = vpop.f32.mrf.mxu0
      %v1408 = vadd.f32 %v1319, %v1407
      %1409 = vmatmul.bf16.gmra.mxu0 %v816
      %v1410 = vpop.f32.mrf.mxu0
      %v1411 = vadd.f32 %v1322, %v1410
      %v1412 = vpop.f32.mrf.mxu0
      %v1413 = vadd.f32 %v1324, %v1412
      %1414 = vmatmul.bf16.gmra.mxu0 %v820
      %v1415 = vpop.f32.mrf.mxu0
      %v1416 = vadd.f32 %v1327, %v1415
      %v1417 = vpop.f32.mrf.mxu0
      %v1418 = vadd.f32 %v1329, %v1417
      %1419 = vmatmul.bf16.gmra.mxu0 %v824
      %v1420 = vpop.f32.mrf.mxu0
      %v1421 = vadd.f32 %v1332, %v1420
      %v1422 = vpop.f32.mrf.mxu0
      %v1423 = vadd.f32 %v1334, %v1422
      %1424 = vmatmul.bf16.gmra.mxu0 %v828
      %v1425 = vpop.f32.mrf.mxu0
      %v1426 = vadd.f32 %v1337, %v1425
      %v1427 = vpop.f32.mrf.mxu0
      %v1428 = vadd.f32 %v1339, %v1427
      %1429 = vmatmul.bf16.gmra.mxu0 %v832
      %v1430 = vpop.f32.mrf.mxu0
      %v1431 = vadd.f32 %v1342, %v1430
      %v1432 = vpop.f32.mrf.mxu0
      %v1433 = vadd.f32 %v1344, %v1432
      %1434 = vmatmul.bf16.gmra.mxu0 %v836
      %v1435 = vpop.f32.mrf.mxu0
      %v1436 = vadd.f32 %v1347, %v1435
      %v1437 = vpop.f32.mrf.mxu0
      %v1438 = vadd.f32 %v1349, %v1437
      %1439 = vmatmul.bf16.gmra.mxu0 %v840
      %v1440 = vpop.f32.mrf.mxu0
      %v1441 = vadd.f32 %v1352, %v1440
      %v1442 = vpop.f32.mrf.mxu0
      %v1443 = vadd.f32 %v1354, %v1442
      %1444 = vmatmul.bf16.gmra.mxu0 %v844
      %v1445 = vpop.f32.mrf.mxu0
      %v1446 = vadd.f32 %v1357, %v1445
      %v1447 = vpop.f32.mrf.mxu0
      %v1448 = vadd.f32 %v1359, %v1447
      %1449 = vmatmul.bf16.gmra.mxu0 %v848
      %v1450 = vpop.f32.mrf.mxu0
      %v1451 = vadd.f32 %v1362, %v1450
      %v1452 = vpop.f32.mrf.mxu0
      %v1453 = vadd.f32 %v1364, %v1452
      %1454 = vmatmul.bf16.gmra.mxu0 %v852
      %v1455 = vpop.f32.mrf.mxu0
      %v1456 = vadd.f32 %v1367, %v1455
      %v1457 = vpop.f32.mrf.mxu0
      %v1458 = vadd.f32 %v1369, %v1457
      %1459 = vmatmul.bf16.gmra.mxu0 %v856
      %v1460 = vpop.f32.mrf.mxu0
      %v1461 = vadd.f32 %v1372, %v1460
      %v1462 = vpop.f32.mrf.mxu0
      %v1463 = vadd.f32 %v1374, %v1462
      %1464 = vmatmul.bf16.gmra.mxu0 %v860
      %v1465 = vpop.f32.mrf.mxu0
      %v1466 = vadd.f32 %v1377, %v1465
      %v1467 = vpop.f32.mrf.mxu0
      %v1468 = vadd.f32 %v1379, %v1467
      %1469 = vmatmul.bf16.gmra.mxu0 %v864
      %v1470 = vpop.f32.mrf.mxu0
      %v1471 = vadd.f32 %v1382, %v1470
      %v1472 = vpop.f32.mrf.mxu0
      %v1473 = vadd.f32 %v1384, %v1472
      %1474 = vmatmul.bf16.gmra.mxu0 %v868
      %v1475 = vpop.f32.mrf.mxu0
      %v1476 = vadd.f32 %v1387, %v1475
      %v1477 = vpop.f32.mrf.mxu0
      %v1478 = vadd.f32 %v1389, %v1477
      %1479 = vmatmul.bf16.gmra.mxu0 %v872
      %v1480 = vpop.f32.mrf.mxu0
      %v1481 = vadd.f32 %v1392, %v1480
      %v1482 = vpop.f32.mrf.mxu0
      %v1483 = vadd.f32 %v1394, %v1482
      %1484 = vdwg.mxu0
      %v1485 = vadd.f32 %v521, %v1406
      %v1486 = vadd.f32 %v522, %v1408
      %v1487 = vadd.f32 %v523, %v1411
      %v1488 = vadd.f32 %v524, %v1413
      %v1489 = vadd.f32 %v525, %v1416
      %v1490 = vadd.f32 %v526, %v1418
      %v1491 = vadd.f32 %v527, %v1421
      %v1492 = vadd.f32 %v528, %v1423
      %v1493 = vadd.f32 %v529, %v1426
      %v1494 = vadd.f32 %v530, %v1428
      %v1495 = vadd.f32 %v531, %v1431
      %v1496 = vadd.f32 %v532, %v1433
      %v1497 = vadd.f32 %v533, %v1436
      %v1498 = vadd.f32 %v534, %v1438
      %v1499 = vadd.f32 %v535, %v1441
      %v1500 = vadd.f32 %v536, %v1443
      %v1501 = vadd.f32 %v537, %v1446
      %v1502 = vadd.f32 %v538, %v1448
      %v1503 = vadd.f32 %v539, %v1451
      %v1504 = vadd.f32 %v540, %v1453
      %v1505 = vadd.f32 %v541, %v1456
      %v1506 = vadd.f32 %v542, %v1458
      %v1507 = vadd.f32 %v543, %v1461
      %v1508 = vadd.f32 %v544, %v1463
      %v1509 = vadd.f32 %v545, %v1466
      %v1510 = vadd.f32 %v546, %v1468
      %v1511 = vadd.f32 %v547, %v1471
      %v1512 = vadd.f32 %v548, %v1473
      %v1513 = vadd.f32 %v549, %v1476
      %v1514 = vadd.f32 %v550, %v1478
      %v1515 = vadd.f32 %v551, %v1481
      %v1516 = vadd.f32 %v552, %v1483
      %1517 = vst [vmem:[#allocation2] sm:$0xff] %v1485
      %1518 = vst [vmem:[#allocation2 + $0x8] sm:$0xff] %v1486
      %1519 = vst [vmem:[#allocation2 + $0x10] sm:$0xff] %v1487
      %1520 = vst [vmem:[#allocation2 + $0x18] sm:$0xff] %v1488
      %1521 = vst [vmem:[#allocation2 + $0x20] sm:$0xff] %v1489
      %1522 = vst [vmem:[#allocation2 + $0x28] sm:$0xff] %v1490
      %1523 = vst [vmem:[#allocation2 + $0x30] sm:$0xff] %v1491
      %1524 = vst [vmem:[#allocation2 + $0x38] sm:$0xff] %v1492
      %1525 = vst [vmem:[#allocation2 + $0x40] sm:$0xff] %v1493
      %1526 = vst [vmem:[#allocation2 + $0x48] sm:$0xff] %v1494
      %1527 = vst [vmem:[#allocation2 + $0x50] sm:$0xff] %v1495
      %1528 = vst [vmem:[#allocation2 + $0x58] sm:$0xff] %v1496
      %1529 = vst [vmem:[#allocation2 + $0x60] sm:$0xff] %v1497
      %1530 = vst [vmem:[#allocation2 + $0x68] sm:$0xff] %v1498
      %1531 = vst [vmem:[#allocation2 + $0x70] sm:$0xff] %v1499
      %1532 = vst [vmem:[#allocation2 + $0x78] sm:$0xff] %v1500
      %1533 = vst [vmem:[#allocation2 + $0x80] sm:$0xff] %v1501
      %1534 = vst [vmem:[#allocation2 + $0x88] sm:$0xff] %v1502
      %1535 = vst [vmem:[#allocation2 + $0x90] sm:$0xff] %v1503
      %1536 = vst [vmem:[#allocation2 + $0x98] sm:$0xff] %v1504
      %1537 = vst [vmem:[#allocation2 + $0xa0] sm:$0xff] %v1505
      %1538 = vst [vmem:[#allocation2 + $0xa8] sm:$0xff] %v1506
      %1539 = vst [vmem:[#allocation2 + $0xb0] sm:$0xff] %v1507
      %1540 = vst [vmem:[#allocation2 + $0xb8] sm:$0xff] %v1508
      %1541 = vst [vmem:[#allocation2 + $0xc0] sm:$0xff] %v1509
      %1542 = vst [vmem:[#allocation2 + $0xc8] sm:$0xff] %v1510
      %1543 = vst [vmem:[#allocation2 + $0xd0] sm:$0xff] %v1511
      %1544 = vst [vmem:[#allocation2 + $0xd8] sm:$0xff] %v1512
      %1545 = vst [vmem:[#allocation2 + $0xe0] sm:$0xff] %v1513
      %1546 = vst [vmem:[#allocation2 + $0xe8] sm:$0xff] %v1514
      %1547 = vst [vmem:[#allocation2 + $0xf0] sm:$0xff] %v1515
      %1548 = vst [vmem:[#allocation2 + $0xf8] sm:$0xff] %v1516
      // Predicated region
      $region65: #{custom_gnn_forward.1} parent=59 // pred_check
        %p1549 = pneg %p416
      $region66: #{custom_gnn_forward.1} parent=59 // pred_check_branch
        %1551 = sbr.rel (%p1549) target = $region68
      $region67: #{custom_gnn_forward.1} parent=59 // pred_region
        %v1552 = vld [vmem:[%s408] sm:$0xf]
        %v1553 = vld [vmem:[%s408 + $0x4] sm:$0xf]
        %v1554 = vld [vmem:[%s408 + $0x8] sm:$0xf]
        %v1555 = vld [vmem:[%s408 + $0xc] sm:$0xf]
        %v1556 = vld [vmem:[%s408 + $0x10] sm:$0xf]
        %v1557 = vld [vmem:[%s408 + $0x14] sm:$0xf]
        %v1558 = vld [vmem:[%s408 + $0x18] sm:$0xf]
        %v1559 = vld [vmem:[%s408 + $0x1c] sm:$0xf]
        %v1560 = vld [vmem:[%s408 + $0x20] sm:$0xf]
        %v1561 = vld [vmem:[%s408 + $0x24] sm:$0xf]
        %v1562 = vld [vmem:[%s408 + $0x28] sm:$0xf]
        %v1563 = vld [vmem:[%s408 + $0x2c] sm:$0xf]
        %v1564 = vld [vmem:[%s408 + $0x30] sm:$0xf]
        %v1565 = vld [vmem:[%s408 + $0x34] sm:$0xf]
        %v1566 = vld [vmem:[%s408 + $0x38] sm:$0xf]
        %v1567 = vld [vmem:[%s408 + $0x3c] sm:$0xf]
        %v1568 = vld [vmem:[%s408 + $0x40] sm:$0xf]
        %v1569 = vld [vmem:[%s408 + $0x44] sm:$0xf]
        %v1570 = vld [vmem:[%s408 + $0x48] sm:$0xf]
        %v1571 = vld [vmem:[%s408 + $0x4c] sm:$0xf]
        %v1572 = vld [vmem:[%s408 + $0x50] sm:$0xf]
        %v1573 = vld [vmem:[%s408 + $0x54] sm:$0xf]
        %v1574 = vld [vmem:[%s408 + $0x58] sm:$0xf]
        %v1575 = vld [vmem:[%s408 + $0x5c] sm:$0xf]
        %v1576 = vld [vmem:[%s408 + $0x60] sm:$0xf]
        %v1577 = vld [vmem:[%s408 + $0x64] sm:$0xf]
        %v1578 = vld [vmem:[%s408 + $0x68] sm:$0xf]
        %v1579 = vld [vmem:[%s408 + $0x6c] sm:$0xf]
        %v1580 = vld [vmem:[%s408 + $0x70] sm:$0xf]
        %v1581 = vld [vmem:[%s408 + $0x74] sm:$0xf]
        %v1582 = vld [vmem:[%s408 + $0x78] sm:$0xf]
        %v1583 = vld [vmem:[%s408 + $0x7c] sm:$0xf]
        %v1584 = vunpack.c.l.bf16 %v1552
        %v1585 = vunpack.c.l.bf16 %v1553
        %v1586 = vunpack.c.l.bf16 %v1554
        %v1587 = vunpack.c.l.bf16 %v1555
        %v1588 = vunpack.c.l.bf16 %v1556
        %v1589 = vunpack.c.l.bf16 %v1557
        %v1590 = vunpack.c.l.bf16 %v1558
        %v1591 = vunpack.c.l.bf16 %v1559
        %v1592 = vunpack.c.l.bf16 %v1560
        %v1593 = vunpack.c.l.bf16 %v1561
        %v1594 = vunpack.c.l.bf16 %v1562
        %v1595 = vunpack.c.l.bf16 %v1563
        %v1596 = vunpack.c.l.bf16 %v1564
        %v1597 = vunpack.c.l.bf16 %v1565
        %v1598 = vunpack.c.l.bf16 %v1566
        %v1599 = vunpack.c.l.bf16 %v1567
        %v1600 = vunpack.c.l.bf16 %v1568
        %v1601 = vunpack.c.l.bf16 %v1569
        %v1602 = vunpack.c.l.bf16 %v1570
        %v1603 = vunpack.c.l.bf16 %v1571
        %v1604 = vunpack.c.l.bf16 %v1572
        %v1605 = vunpack.c.l.bf16 %v1573
        %v1606 = vunpack.c.l.bf16 %v1574
        %v1607 = vunpack.c.l.bf16 %v1575
        %v1608 = vunpack.c.l.bf16 %v1576
        %v1609 = vunpack.c.l.bf16 %v1577
        %v1610 = vunpack.c.l.bf16 %v1578
        %v1611 = vunpack.c.l.bf16 %v1579
        %v1612 = vunpack.c.l.bf16 %v1580
        %v1613 = vunpack.c.l.bf16 %v1581
        %v1614 = vunpack.c.l.bf16 %v1582
        %v1615 = vunpack.c.l.bf16 %v1583
        %v1616 = vld [vmem:[%s3] sm:$0xff]
        %v1617 = vld [vmem:[%s3 + $0x8] sm:$0xff]
        %v1618 = vld [vmem:[%s3 + $0x10] sm:$0xff]
        %v1619 = vld [vmem:[%s3 + $0x18] sm:$0xff]
        %v1620 = vld [vmem:[%s3 + $0x20] sm:$0xff]
        %v1621 = vld [vmem:[%s3 + $0x28] sm:$0xff]
        %v1622 = vld [vmem:[%s3 + $0x30] sm:$0xff]
        %v1623 = vld [vmem:[%s3 + $0x38] sm:$0xff]
        %v1624 = vld [vmem:[%s3 + $0x40] sm:$0xff]
        %v1625 = vld [vmem:[%s3 + $0x48] sm:$0xff]
        %v1626 = vld [vmem:[%s3 + $0x50] sm:$0xff]
        %v1627 = vld [vmem:[%s3 + $0x58] sm:$0xff]
        %v1628 = vld [vmem:[%s3 + $0x60] sm:$0xff]
        %v1629 = vld [vmem:[%s3 + $0x68] sm:$0xff]
        %v1630 = vld [vmem:[%s3 + $0x70] sm:$0xff]
        %v1631 = vld [vmem:[%s3 + $0x78] sm:$0xff]
        %v1632 = vld [vmem:[#allocation2] sm:$0xff]
        %v1633 = vld [vmem:[#allocation2 + $0x8] sm:$0xff]
        %v1634 = vld [vmem:[#allocation2 + $0x10] sm:$0xff]
        %v1635 = vld [vmem:[#allocation2 + $0x18] sm:$0xff]
        %v1636 = vld [vmem:[#allocation2 + $0x20] sm:$0xff]
        %v1637 = vld [vmem:[#allocation2 + $0x28] sm:$0xff]
        %v1638 = vld [vmem:[#allocation2 + $0x30] sm:$0xff]
        %v1639 = vld [vmem:[#allocation2 + $0x38] sm:$0xff]
        %v1640 = vld [vmem:[#allocation2 + $0x40] sm:$0xff]
        %v1641 = vld [vmem:[#allocation2 + $0x48] sm:$0xff]
        %v1642 = vld [vmem:[#allocation2 + $0x50] sm:$0xff]
        %v1643 = vld [vmem:[#allocation2 + $0x58] sm:$0xff]
        %v1644 = vld [vmem:[#allocation2 + $0x60] sm:$0xff]
        %v1645 = vld [vmem:[#allocation2 + $0x68] sm:$0xff]
        %v1646 = vld [vmem:[#allocation2 + $0x70] sm:$0xff]
        %v1647 = vld [vmem:[#allocation2 + $0x78] sm:$0xff]
        %v1648 = vld [vmem:[#allocation2 + $0x80] sm:$0xff]
        %v1649 = vld [vmem:[#allocation2 + $0x88] sm:$0xff]
        %v1650 = vld [vmem:[#allocation2 + $0x90] sm:$0xff]
        %v1651 = vld [vmem:[#allocation2 + $0x98] sm:$0xff]
        %v1652 = vld [vmem:[#allocation2 + $0xa0] sm:$0xff]
        %v1653 = vld [vmem:[#allocation2 + $0xa8] sm:$0xff]
        %v1654 = vld [vmem:[#allocation2 + $0xb0] sm:$0xff]
        %v1655 = vld [vmem:[#allocation2 + $0xb8] sm:$0xff]
        %v1656 = vld [vmem:[#allocation2 + $0xc0] sm:$0xff]
        %v1657 = vld [vmem:[#allocation2 + $0xc8] sm:$0xff]
        %v1658 = vld [vmem:[#allocation2 + $0xd0] sm:$0xff]
        %v1659 = vld [vmem:[#allocation2 + $0xd8] sm:$0xff]
        %v1660 = vld [vmem:[#allocation2 + $0xe0] sm:$0xff]
        %v1661 = vld [vmem:[#allocation2 + $0xe8] sm:$0xff]
        %v1662 = vld [vmem:[#allocation2 + $0xf0] sm:$0xff]
        %v1663 = vld [vmem:[#allocation2 + $0xf8] sm:$0xff]
        %v1664 = vld [vmem:[%s4] sm:$0xff]
        %v1665 = vld [vmem:[%s4 + $0x8] sm:$0xff]
        %v1666 = vld [vmem:[%s4 + $0x10] sm:$0xff]
        %v1667 = vld [vmem:[%s4 + $0x18] sm:$0xff]
        %v1668 = vld [vmem:[%s4 + $0x20] sm:$0xff]
        %v1669 = vld [vmem:[%s4 + $0x28] sm:$0xff]
        %v1670 = vld [vmem:[%s4 + $0x30] sm:$0xff]
        %v1671 = vld [vmem:[%s4 + $0x38] sm:$0xff]
        %v1672 = vld [vmem:[%s4 + $0x40] sm:$0xff]
        %v1673 = vld [vmem:[%s4 + $0x48] sm:$0xff]
        %v1674 = vld [vmem:[%s4 + $0x50] sm:$0xff]
        %v1675 = vld [vmem:[%s4 + $0x58] sm:$0xff]
        %v1676 = vld [vmem:[%s4 + $0x60] sm:$0xff]
        %v1677 = vld [vmem:[%s4 + $0x68] sm:$0xff]
        %v1678 = vld [vmem:[%s4 + $0x70] sm:$0xff]
        %v1679 = vld [vmem:[%s4 + $0x78] sm:$0xff]
        %1680 = vmatpush.msra.mxu0 %v1679
        %1681 = vmatpush.msra.mxu0 %v1678
        %1682 = vmatpush.msra.mxu0 %v1677
        %1683 = vmatpush.msra.mxu0 %v1676
        %1684 = vmatpush.msra.mxu0 %v1675
        %1685 = vmatpush.msra.mxu0 %v1674
        %1686 = vmatpush.msra.mxu0 %v1673
        %1687 = vmatpush.msra.mxu0 %v1672
        %1688 = vmatpush.msra.mxu0 %v1671
        %1689 = vmatpush.msra.mxu0 %v1670
        %1690 = vmatpush.msra.mxu0 %v1669
        %1691 = vmatpush.msra.mxu0 %v1668
        %1692 = vmatpush.msra.mxu0 %v1667
        %1693 = vmatpush.msra.mxu0 %v1666
        %1694 = vmatpush.msra.mxu0 %v1665
        %1695 = vmatpush.msra.mxu0 %v1664
        %1696 = vmatmul.f32.gmra.mxu0 %v1632
        %v1697 = vpop.f32.mrf.mxu0
        %v1698 = vadd.f32 0.0, %v1697
        %1699 = vmatmul.f32.gmra.mxu0 %v1633
        %v1700 = vpop.f32.mrf.mxu0
        %v1701 = vadd.f32 0.0, %v1700
        %1702 = vmatmul.f32.gmra.mxu0 %v1634
        %v1703 = vpop.f32.mrf.mxu0
        %v1704 = vadd.f32 0.0, %v1703
        %1705 = vmatmul.f32.gmra.mxu0 %v1635
        %v1706 = vpop.f32.mrf.mxu0
        %v1707 = vadd.f32 0.0, %v1706
        %1708 = vmatmul.f32.gmra.mxu0 %v1636
        %v1709 = vpop.f32.mrf.mxu0
        %v1710 = vadd.f32 0.0, %v1709
        %1711 = vmatmul.f32.gmra.mxu0 %v1637
        %v1712 = vpop.f32.mrf.mxu0
        %v1713 = vadd.f32 0.0, %v1712
        %1714 = vmatmul.f32.gmra.mxu0 %v1638
        %v1715 = vpop.f32.mrf.mxu0
        %v1716 = vadd.f32 0.0, %v1715
        %1717 = vmatmul.f32.gmra.mxu0 %v1639
        %v1718 = vpop.f32.mrf.mxu0
        %v1719 = vadd.f32 0.0, %v1718
        %1720 = vmatmul.f32.gmra.mxu0 %v1640
        %v1721 = vpop.f32.mrf.mxu0
        %v1722 = vadd.f32 0.0, %v1721
        %1723 = vmatmul.f32.gmra.mxu0 %v1641
        %v1724 = vpop.f32.mrf.mxu0
        %v1725 = vadd.f32 0.0, %v1724
        %1726 = vmatmul.f32.gmra.mxu0 %v1642
        %v1727 = vpop.f32.mrf.mxu0
        %v1728 = vadd.f32 0.0, %v1727
        %1729 = vmatmul.f32.gmra.mxu0 %v1643
        %v1730 = vpop.f32.mrf.mxu0
        %v1731 = vadd.f32 0.0, %v1730
        %1732 = vmatmul.f32.gmra.mxu0 %v1644
        %v1733 = vpop.f32.mrf.mxu0
        %v1734 = vadd.f32 0.0, %v1733
        %1735 = vmatmul.f32.gmra.mxu0 %v1645
        %v1736 = vpop.f32.mrf.mxu0
        %v1737 = vadd.f32 0.0, %v1736
        %1738 = vmatmul.f32.gmra.mxu0 %v1646
        %v1739 = vpop.f32.mrf.mxu0
        %v1740 = vadd.f32 0.0, %v1739
        %1741 = vmatmul.f32.gmra.mxu0 %v1647
        %v1742 = vpop.f32.mrf.mxu0
        %v1743 = vadd.f32 0.0, %v1742
        %1744 = vmatmul.f32.gmra.mxu0 %v1648
        %v1745 = vpop.f32.mrf.mxu0
        %v1746 = vadd.f32 0.0, %v1745
        %1747 = vmatmul.f32.gmra.mxu0 %v1649
        %v1748 = vpop.f32.mrf.mxu0
        %v1749 = vadd.f32 0.0, %v1748
        %1750 = vmatmul.f32.gmra.mxu0 %v1650
        %v1751 = vpop.f32.mrf.mxu0
        %v1752 = vadd.f32 0.0, %v1751
        %1753 = vmatmul.f32.gmra.mxu0 %v1651
        %v1754 = vpop.f32.mrf.mxu0
        %v1755 = vadd.f32 0.0, %v1754
        %1756 = vmatmul.f32.gmra.mxu0 %v1652
        %v1757 = vpop.f32.mrf.mxu0
        %v1758 = vadd.f32 0.0, %v1757
        %1759 = vmatmul.f32.gmra.mxu0 %v1653
        %v1760 = vpop.f32.mrf.mxu0
        %v1761 = vadd.f32 0.0, %v1760
        %1762 = vmatmul.f32.gmra.mxu0 %v1654
        %v1763 = vpop.f32.mrf.mxu0
        %v1764 = vadd.f32 0.0, %v1763
        %1765 = vmatmul.f32.gmra.mxu0 %v1655
        %v1766 = vpop.f32.mrf.mxu0
        %v1767 = vadd.f32 0.0, %v1766
        %1768 = vmatmul.f32.gmra.mxu0 %v1656
        %v1769 = vpop.f32.mrf.mxu0
        %v1770 = vadd.f32 0.0, %v1769
        %1771 = vmatmul.f32.gmra.mxu0 %v1657
        %v1772 = vpop.f32.mrf.mxu0
        %v1773 = vadd.f32 0.0, %v1772
        %1774 = vmatmul.f32.gmra.mxu0 %v1658
        %v1775 = vpop.f32.mrf.mxu0
        %v1776 = vadd.f32 0.0, %v1775
        %1777 = vmatmul.f32.gmra.mxu0 %v1659
        %v1778 = vpop.f32.mrf.mxu0
        %v1779 = vadd.f32 0.0, %v1778
        %1780 = vmatmul.f32.gmra.mxu0 %v1660
        %v1781 = vpop.f32.mrf.mxu0
        %v1782 = vadd.f32 0.0, %v1781
        %1783 = vmatmul.f32.gmra.mxu0 %v1661
        %v1784 = vpop.f32.mrf.mxu0
        %v1785 = vadd.f32 0.0, %v1784
        %1786 = vmatmul.f32.gmra.mxu0 %v1662
        %v1787 = vpop.f32.mrf.mxu0
        %v1788 = vadd.f32 0.0, %v1787
        %1789 = vmatmul.f32.gmra.mxu0 %v1663
        %v1790 = vpop.f32.mrf.mxu0
        %v1791 = vadd.f32 0.0, %v1790
        %1792 = vdwg.mxu0
        %1793 = vmatpush.msra.mxu0 %v1631
        %1794 = vmatpush.msra.mxu0 %v1630
        %1795 = vmatpush.msra.mxu0 %v1629
        %1796 = vmatpush.msra.mxu0 %v1628
        %1797 = vmatpush.msra.mxu0 %v1627
        %1798 = vmatpush.msra.mxu0 %v1626
        %1799 = vmatpush.msra.mxu0 %v1625
        %1800 = vmatpush.msra.mxu0 %v1624
        %1801 = vmatpush.msra.mxu0 %v1623
        %1802 = vmatpush.msra.mxu0 %v1622
        %1803 = vmatpush.msra.mxu0 %v1621
        %1804 = vmatpush.msra.mxu0 %v1620
        %1805 = vmatpush.msra.mxu0 %v1619
        %1806 = vmatpush.msra.mxu0 %v1618
        %1807 = vmatpush.msra.mxu0 %v1617
        %1808 = vmatpush.msra.mxu0 %v1616
        %1809 = vmatmul.f32.gmra.mxu0 %v1584
        %v1810 = vpop.f32.mrf.mxu0
        %v1811 = vadd.f32 %v1698, %v1810
        %1812 = vmatmul.f32.gmra.mxu0 %v1585
        %v1813 = vpop.f32.mrf.mxu0
        %v1814 = vadd.f32 %v1701, %v1813
        %1815 = vmatmul.f32.gmra.mxu0 %v1586
        %v1816 = vpop.f32.mrf.mxu0
        %v1817 = vadd.f32 %v1704, %v1816
        %1818 = vmatmul.f32.gmra.mxu0 %v1587
        %v1819 = vpop.f32.mrf.mxu0
        %v1820 = vadd.f32 %v1707, %v1819
        %1821 = vmatmul.f32.gmra.mxu0 %v1588
        %v1822 = vpop.f32.mrf.mxu0
        %v1823 = vadd.f32 %v1710, %v1822
        %1824 = vmatmul.f32.gmra.mxu0 %v1589
        %v1825 = vpop.f32.mrf.mxu0
        %v1826 = vadd.f32 %v1713, %v1825
        %1827 = vmatmul.f32.gmra.mxu0 %v1590
        %v1828 = vpop.f32.mrf.mxu0
        %v1829 = vadd.f32 %v1716, %v1828
        %1830 = vmatmul.f32.gmra.mxu0 %v1591
        %v1831 = vpop.f32.mrf.mxu0
        %v1832 = vadd.f32 %v1719, %v1831
        %1833 = vmatmul.f32.gmra.mxu0 %v1592
        %v1834 = vpop.f32.mrf.mxu0
        %v1835 = vadd.f32 %v1722, %v1834
        %1836 = vmatmul.f32.gmra.mxu0 %v1593
        %v1837 = vpop.f32.mrf.mxu0
        %v1838 = vadd.f32 %v1725, %v1837
        %1839 = vmatmul.f32.gmra.mxu0 %v1594
        %v1840 = vpop.f32.mrf.mxu0
        %v1841 = vadd.f32 %v1728, %v1840
        %1842 = vmatmul.f32.gmra.mxu0 %v1595
        %v1843 = vpop.f32.mrf.mxu0
        %v1844 = vadd.f32 %v1731, %v1843
        %1845 = vmatmul.f32.gmra.mxu0 %v1596
        %v1846 = vpop.f32.mrf.mxu0
        %v1847 = vadd.f32 %v1734, %v1846
        %1848 = vmatmul.f32.gmra.mxu0 %v1597
        %v1849 = vpop.f32.mrf.mxu0
        %v1850 = vadd.f32 %v1737, %v1849
        %1851 = vmatmul.f32.gmra.mxu0 %v1598
        %v1852 = vpop.f32.mrf.mxu0
        %v1853 = vadd.f32 %v1740, %v1852
        %1854 = vmatmul.f32.gmra.mxu0 %v1599
        %v1855 = vpop.f32.mrf.mxu0
        %v1856 = vadd.f32 %v1743, %v1855
        %1857 = vmatmul.f32.gmra.mxu0 %v1600
        %v1858 = vpop.f32.mrf.mxu0
        %v1859 = vadd.f32 %v1746, %v1858
        %1860 = vmatmul.f32.gmra.mxu0 %v1601
        %v1861 = vpop.f32.mrf.mxu0
        %v1862 = vadd.f32 %v1749, %v1861
        %1863 = vmatmul.f32.gmra.mxu0 %v1602
        %v1864 = vpop.f32.mrf.mxu0
        %v1865 = vadd.f32 %v1752, %v1864
        %1866 = vmatmul.f32.gmra.mxu0 %v1603
        %v1867 = vpop.f32.mrf.mxu0
        %v1868 = vadd.f32 %v1755, %v1867
        %1869 = vmatmul.f32.gmra.mxu0 %v1604
        %v1870 = vpop.f32.mrf.mxu0
        %v1871 = vadd.f32 %v1758, %v1870
        %1872 = vmatmul.f32.gmra.mxu0 %v1605
        %v1873 = vpop.f32.mrf.mxu0
        %v1874 = vadd.f32 %v1761, %v1873
        %1875 = vmatmul.f32.gmra.mxu0 %v1606
        %v1876 = vpop.f32.mrf.mxu0
        %v1877 = vadd.f32 %v1764, %v1876
        %1878 = vmatmul.f32.gmra.mxu0 %v1607
        %v1879 = vpop.f32.mrf.mxu0
        %v1880 = vadd.f32 %v1767, %v1879
        %1881 = vmatmul.f32.gmra.mxu0 %v1608
        %v1882 = vpop.f32.mrf.mxu0
        %v1883 = vadd.f32 %v1770, %v1882
        %1884 = vmatmul.f32.gmra.mxu0 %v1609
        %v1885 = vpop.f32.mrf.mxu0
        %v1886 = vadd.f32 %v1773, %v1885
        %1887 = vmatmul.f32.gmra.mxu0 %v1610
        %v1888 = vpop.f32.mrf.mxu0
        %v1889 = vadd.f32 %v1776, %v1888
        %1890 = vmatmul.f32.gmra.mxu0 %v1611
        %v1891 = vpop.f32.mrf.mxu0
        %v1892 = vadd.f32 %v1779, %v1891
        %1893 = vmatmul.f32.gmra.mxu0 %v1612
        %v1894 = vpop.f32.mrf.mxu0
        %v1895 = vadd.f32 %v1782, %v1894
        %1896 = vmatmul.f32.gmra.mxu0 %v1613
        %v1897 = vpop.f32.mrf.mxu0
        %v1898 = vadd.f32 %v1785, %v1897
        %1899 = vmatmul.f32.gmra.mxu0 %v1614
        %v1900 = vpop.f32.mrf.mxu0
        %v1901 = vadd.f32 %v1788, %v1900
        %1902 = vmatmul.f32.gmra.mxu0 %v1615
        %v1903 = vpop.f32.mrf.mxu0
        %v1904 = vadd.f32 %v1791, %v1903
        %1905 = vdwg.mxu0
        %v1906 = vld [vmem:[%s5] sm:$0x1]
        %v1908 = vperm.slane %v1906, 0
        %v1910 = vadd.f32 %v1811, %v1908
        %v1911 = vadd.f32 %v1814, %v1908
        %v1912 = vadd.f32 %v1817, %v1908
        %v1913 = vadd.f32 %v1820, %v1908
        %v1914 = vadd.f32 %v1823, %v1908
        %v1915 = vadd.f32 %v1826, %v1908
        %v1916 = vadd.f32 %v1829, %v1908
        %v1917 = vadd.f32 %v1832, %v1908
        %v1918 = vadd.f32 %v1835, %v1908
        %v1919 = vadd.f32 %v1838, %v1908
        %v1920 = vadd.f32 %v1841, %v1908
        %v1921 = vadd.f32 %v1844, %v1908
        %v1922 = vadd.f32 %v1847, %v1908
        %v1923 = vadd.f32 %v1850, %v1908
        %v1924 = vadd.f32 %v1853, %v1908
        %v1925 = vadd.f32 %v1856, %v1908
        %v1926 = vadd.f32 %v1859, %v1908
        %v1927 = vadd.f32 %v1862, %v1908
        %v1928 = vadd.f32 %v1865, %v1908
        %v1929 = vadd.f32 %v1868, %v1908
        %v1930 = vadd.f32 %v1871, %v1908
        %v1931 = vadd.f32 %v1874, %v1908
        %v1932 = vadd.f32 %v1877, %v1908
        %v1933 = vadd.f32 %v1880, %v1908
        %v1934 = vadd.f32 %v1883, %v1908
        %v1935 = vadd.f32 %v1886, %v1908
        %v1936 = vadd.f32 %v1889, %v1908
        %v1937 = vadd.f32 %v1892, %v1908
        %v1938 = vadd.f32 %v1895, %v1908
        %v1939 = vadd.f32 %v1898, %v1908
        %v1940 = vadd.f32 %v1901, %v1908
        %v1941 = vadd.f32 %v1904, %v1908
        %vm1942 = vcmp.gt.f32.partialorder %v1910, 0.0
        %vm1943 = vcmp.gt.f32.partialorder %v1911, 0.0
        %vm1944 = vcmp.gt.f32.partialorder %v1912, 0.0
        %vm1945 = vcmp.gt.f32.partialorder %v1913, 0.0
        %vm1946 = vcmp.gt.f32.partialorder %v1914, 0.0
        %vm1947 = vcmp.gt.f32.partialorder %v1915, 0.0
        %vm1948 = vcmp.gt.f32.partialorder %v1916, 0.0
        %vm1949 = vcmp.gt.f32.partialorder %v1917, 0.0
        %vm1950 = vcmp.gt.f32.partialorder %v1918, 0.0
        %vm1951 = vcmp.gt.f32.partialorder %v1919, 0.0
        %vm1952 = vcmp.gt.f32.partialorder %v1920, 0.0
        %vm1953 = vcmp.gt.f32.partialorder %v1921, 0.0
        %vm1954 = vcmp.gt.f32.partialorder %v1922, 0.0
        %vm1955 = vcmp.gt.f32.partialorder %v1923, 0.0
        %vm1956 = vcmp.gt.f32.partialorder %v1924, 0.0
        %vm1957 = vcmp.gt.f32.partialorder %v1925, 0.0
        %vm1958 = vcmp.gt.f32.partialorder %v1926, 0.0
        %vm1959 = vcmp.gt.f32.partialorder %v1927, 0.0
        %vm1960 = vcmp.gt.f32.partialorder %v1928, 0.0
        %vm1961 = vcmp.gt.f32.partialorder %v1929, 0.0
        %vm1962 = vcmp.gt.f32.partialorder %v1930, 0.0
        %vm1963 = vcmp.gt.f32.partialorder %v1931, 0.0
        %vm1964 = vcmp.gt.f32.partialorder %v1932, 0.0
        %vm1965 = vcmp.gt.f32.partialorder %v1933, 0.0
        %vm1966 = vcmp.gt.f32.partialorder %v1934, 0.0
        %vm1967 = vcmp.gt.f32.partialorder %v1935, 0.0
        %vm1968 = vcmp.gt.f32.partialorder %v1936, 0.0
        %vm1969 = vcmp.gt.f32.partialorder %v1937, 0.0
        %vm1970 = vcmp.gt.f32.partialorder %v1938, 0.0
        %vm1971 = vcmp.gt.f32.partialorder %v1939, 0.0
        %vm1972 = vcmp.gt.f32.partialorder %v1940, 0.0
        %vm1973 = vcmp.gt.f32.partialorder %v1941, 0.0
        %v1974 = vsel %vm1942, 0.0, %v1910
        %v1975 = vsel %vm1943, 0.0, %v1911
        %v1976 = vsel %vm1944, 0.0, %v1912
        %v1977 = vsel %vm1945, 0.0, %v1913
        %v1978 = vsel %vm1946, 0.0, %v1914
        %v1979 = vsel %vm1947, 0.0, %v1915
        %v1980 = vsel %vm1948, 0.0, %v1916
        %v1981 = vsel %vm1949, 0.0, %v1917
        %v1982 = vsel %vm1950, 0.0, %v1918
        %v1983 = vsel %vm1951, 0.0, %v1919
        %v1984 = vsel %vm1952, 0.0, %v1920
        %v1985 = vsel %vm1953, 0.0, %v1921
        %v1986 = vsel %vm1954, 0.0, %v1922
        %v1987 = vsel %vm1955, 0.0, %v1923
        %v1988 = vsel %vm1956, 0.0, %v1924
        %v1989 = vsel %vm1957, 0.0, %v1925
        %v1990 = vsel %vm1958, 0.0, %v1926
        %v1991 = vsel %vm1959, 0.0, %v1927
        %v1992 = vsel %vm1960, 0.0, %v1928
        %v1993 = vsel %vm1961, 0.0, %v1929
        %v1994 = vsel %vm1962, 0.0, %v1930
        %v1995 = vsel %vm1963, 0.0, %v1931
        %v1996 = vsel %vm1964, 0.0, %v1932
        %v1997 = vsel %vm1965, 0.0, %v1933
        %v1998 = vsel %vm1966, 0.0, %v1934
        %v1999 = vsel %vm1967, 0.0, %v1935
        %v2000 = vsel %vm1968, 0.0, %v1936
        %v2001 = vsel %vm1969, 0.0, %v1937
        %v2002 = vsel %vm1970, 0.0, %v1938
        %v2003 = vsel %vm1971, 0.0, %v1939
        %v2004 = vsel %vm1972, 0.0, %v1940
        %v2005 = vsel %vm1973, 0.0, %v1941
        %v2006 = vmul.f32 %v1974, 1.442695
        %v2007 = vpow.pop %v2006
        %v2008 = vmul.f32 %v1975, 1.442695
        %v2009 = vpow.pop %v2008
        %v2010 = vmul.f32 %v1976, 1.442695
        %v2011 = vpow.pop %v2010
        %v2012 = vmul.f32 %v1977, 1.442695
        %v2013 = vpow.pop %v2012
        %v2014 = vmul.f32 %v1978, 1.442695
        %v2015 = vpow.pop %v2014
        %v2016 = vmul.f32 %v1979, 1.442695
        %v2017 = vpow.pop %v2016
        %v2018 = vmul.f32 %v1980, 1.442695
        %v2019 = vpow.pop %v2018
        %v2020 = vmul.f32 %v1981, 1.442695
        %v2021 = vpow.pop %v2020
        %v2022 = vmul.f32 %v1982, 1.442695
        %v2023 = vpow.pop %v2022
        %v2024 = vmul.f32 %v1983, 1.442695
        %v2025 = vpow.pop %v2024
        %v2026 = vmul.f32 %v1984, 1.442695
        %v2027 = vpow.pop %v2026
        %v2028 = vmul.f32 %v1985, 1.442695
        %v2029 = vpow.pop %v2028
        %v2030 = vmul.f32 %v1986, 1.442695
        %v2031 = vpow.pop %v2030
        %v2032 = vmul.f32 %v1987, 1.442695
        %v2033 = vpow.pop %v2032
        %v2034 = vmul.f32 %v1988, 1.442695
        %v2035 = vpow.pop %v2034
        %v2036 = vmul.f32 %v1989, 1.442695
        %v2037 = vpow.pop %v2036
        %v2038 = vmul.f32 %v1990, 1.442695
        %v2039 = vpow.pop %v2038
        %v2040 = vmul.f32 %v1991, 1.442695
        %v2041 = vpow.pop %v2040
        %v2042 = vmul.f32 %v1992, 1.442695
        %v2043 = vpow.pop %v2042
        %v2044 = vmul.f32 %v1993, 1.442695
        %v2045 = vpow.pop %v2044
        %v2046 = vmul.f32 %v1994, 1.442695
        %v2047 = vpow.pop %v2046
        %v2048 = vmul.f32 %v1995, 1.442695
        %v2049 = vpow.pop %v2048
        %v2050 = vmul.f32 %v1996, 1.442695
        %v2051 = vpow.pop %v2050
        %v2052 = vmul.f32 %v1997, 1.442695
        %v2053 = vpow.pop %v2052
        %v2054 = vmul.f32 %v1998, 1.442695
        %v2055 = vpow.pop %v2054
        %v2056 = vmul.f32 %v1999, 1.442695
        %v2057 = vpow.pop %v2056
        %v2058 = vmul.f32 %v2000, 1.442695
        %v2059 = vpow.pop %v2058
        %v2060 = vmul.f32 %v2001, 1.442695
        %v2061 = vpow.pop %v2060
        %v2062 = vmul.f32 %v2002, 1.442695
        %v2063 = vpow.pop %v2062
        %v2064 = vmul.f32 %v2003, 1.442695
        %v2065 = vpow.pop %v2064
        %v2066 = vmul.f32 %v2004, 1.442695
        %v2067 = vpow.pop %v2066
        %v2068 = vmul.f32 %v2005, 1.442695
        %v2069 = vpow.pop %v2068
        %v2070 = vsub.f32 %v2007, 1.0
        %v2071 = vsub.f32 %v2009, 1.0
        %v2072 = vsub.f32 %v2011, 1.0
        %v2073 = vsub.f32 %v2013, 1.0
        %v2074 = vsub.f32 %v2015, 1.0
        %v2075 = vsub.f32 %v2017, 1.0
        %v2076 = vsub.f32 %v2019, 1.0
        %v2077 = vsub.f32 %v2021, 1.0
        %v2078 = vsub.f32 %v2023, 1.0
        %v2079 = vsub.f32 %v2025, 1.0
        %v2080 = vsub.f32 %v2027, 1.0
        %v2081 = vsub.f32 %v2029, 1.0
        %v2082 = vsub.f32 %v2031, 1.0
        %v2083 = vsub.f32 %v2033, 1.0
        %v2084 = vsub.f32 %v2035, 1.0
        %v2085 = vsub.f32 %v2037, 1.0
        %v2086 = vsub.f32 %v2039, 1.0
        %v2087 = vsub.f32 %v2041, 1.0
        %v2088 = vsub.f32 %v2043, 1.0
        %v2089 = vsub.f32 %v2045, 1.0
        %v2090 = vsub.f32 %v2047, 1.0
        %v2091 = vsub.f32 %v2049, 1.0
        %v2092 = vsub.f32 %v2051, 1.0
        %v2093 = vsub.f32 %v2053, 1.0
        %v2094 = vsub.f32 %v2055, 1.0
        %v2095 = vsub.f32 %v2057, 1.0
        %v2096 = vsub.f32 %v2059, 1.0
        %v2097 = vsub.f32 %v2061, 1.0
        %v2098 = vsub.f32 %v2063, 1.0
        %v2099 = vsub.f32 %v2065, 1.0
        %v2100 = vsub.f32 %v2067, 1.0
        %v2101 = vsub.f32 %v2069, 1.0
        %v2102 = vsel %vm1942, %v1910, %v2070
        %v2103 = vsel %vm1943, %v1911, %v2071
        %v2104 = vsel %vm1944, %v1912, %v2072
        %v2105 = vsel %vm1945, %v1913, %v2073
        %v2106 = vsel %vm1946, %v1914, %v2074
        %v2107 = vsel %vm1947, %v1915, %v2075
        %v2108 = vsel %vm1948, %v1916, %v2076
        %v2109 = vsel %vm1949, %v1917, %v2077
        %v2110 = vsel %vm1950, %v1918, %v2078
        %v2111 = vsel %vm1951, %v1919, %v2079
        %v2112 = vsel %vm1952, %v1920, %v2080
        %v2113 = vsel %vm1953, %v1921, %v2081
        %v2114 = vsel %vm1954, %v1922, %v2082
        %v2115 = vsel %vm1955, %v1923, %v2083
        %v2116 = vsel %vm1956, %v1924, %v2084
        %v2117 = vsel %vm1957, %v1925, %v2085
        %v2118 = vsel %vm1958, %v1926, %v2086
        %v2119 = vsel %vm1959, %v1927, %v2087
        %v2120 = vsel %vm1960, %v1928, %v2088
        %v2121 = vsel %vm1961, %v1929, %v2089
        %v2122 = vsel %vm1962, %v1930, %v2090
        %v2123 = vsel %vm1963, %v1931, %v2091
        %v2124 = vsel %vm1964, %v1932, %v2092
        %v2125 = vsel %vm1965, %v1933, %v2093
        %v2126 = vsel %vm1966, %v1934, %v2094
        %v2127 = vsel %vm1967, %v1935, %v2095
        %v2128 = vsel %vm1968, %v1936, %v2096
        %v2129 = vsel %vm1969, %v1937, %v2097
        %v2130 = vsel %vm1970, %v1938, %v2098
        %v2131 = vsel %vm1971, %v1939, %v2099
        %v2132 = vsel %vm1972, %v1940, %v2100
        %v2133 = vsel %vm1973, %v1941, %v2101
        %v2134 = vld [vmem:[%s6] sm:$0xff]
        %v2135 = vld [vmem:[%s6 + $0x8] sm:$0xff]
        %v2136 = vld [vmem:[%s6 + $0x10] sm:$0xff]
        %v2137 = vld [vmem:[%s6 + $0x18] sm:$0xff]
        %v2138 = vld [vmem:[%s6 + $0x20] sm:$0xff]
        %v2139 = vld [vmem:[%s6 + $0x28] sm:$0xff]
        %v2140 = vld [vmem:[%s6 + $0x30] sm:$0xff]
        %v2141 = vld [vmem:[%s6 + $0x38] sm:$0xff]
        %v2142 = vld [vmem:[%s6 + $0x40] sm:$0xff]
        %v2143 = vld [vmem:[%s6 + $0x48] sm:$0xff]
        %v2144 = vld [vmem:[%s6 + $0x50] sm:$0xff]
        %v2145 = vld [vmem:[%s6 + $0x58] sm:$0xff]
        %v2146 = vld [vmem:[%s6 + $0x60] sm:$0xff]
        %v2147 = vld [vmem:[%s6 + $0x68] sm:$0xff]
        %v2148 = vld [vmem:[%s6 + $0x70] sm:$0xff]
        %v2149 = vld [vmem:[%s6 + $0x78] sm:$0xff]
        %v2150 = vld [vmem:[%s7] sm:$0x1]
        %v2152 = vperm.slane %v2150, 0
        %2154 = vmatpush.msra.mxu0 %v2149
        %2155 = vmatpush.msra.mxu0 %v2148
        %2156 = vmatpush.msra.mxu0 %v2147
        %2157 = vmatpush.msra.mxu0 %v2146
        %2158 = vmatpush.msra.mxu0 %v2145
        %2159 = vmatpush.msra.mxu0 %v2144
        %2160 = vmatpush.msra.mxu0 %v2143
        %2161 = vmatpush.msra.mxu0 %v2142
        %2162 = vmatpush.msra.mxu0 %v2141
        %2163 = vmatpush.msra.mxu0 %v2140
        %2164 = vmatpush.msra.mxu0 %v2139
        %2165 = vmatpush.msra.mxu0 %v2138
        %2166 = vmatpush.msra.mxu0 %v2137
        %2167 = vmatpush.msra.mxu0 %v2136
        %2168 = vmatpush.msra.mxu0 %v2135
        %2169 = vmatpush.msra.mxu0 %v2134
        %2170 = vmatmul.f32.gmra.mxu0 %v2102
        %v2171 = vpop.f32.mrf.mxu0
        %v2172 = vadd.f32 %v2152, %v2171
        %2173 = vmatmul.f32.gmra.mxu0 %v2103
        %v2174 = vpop.f32.mrf.mxu0
        %v2175 = vadd.f32 %v2152, %v2174
        %2176 = vmatmul.f32.gmra.mxu0 %v2104
        %v2177 = vpop.f32.mrf.mxu0
        %v2178 = vadd.f32 %v2152, %v2177
        %2179 = vmatmul.f32.gmra.mxu0 %v2105
        %v2180 = vpop.f32.mrf.mxu0
        %v2181 = vadd.f32 %v2152, %v2180
        %2182 = vmatmul.f32.gmra.mxu0 %v2106
        %v2183 = vpop.f32.mrf.mxu0
        %v2184 = vadd.f32 %v2152, %v2183
        %2185 = vmatmul.f32.gmra.mxu0 %v2107
        %v2186 = vpop.f32.mrf.mxu0
        %v2187 = vadd.f32 %v2152, %v2186
        %2188 = vmatmul.f32.gmra.mxu0 %v2108
        %v2189 = vpop.f32.mrf.mxu0
        %v2190 = vadd.f32 %v2152, %v2189
        %2191 = vmatmul.f32.gmra.mxu0 %v2109
        %v2192 = vpop.f32.mrf.mxu0
        %v2193 = vadd.f32 %v2152, %v2192
        %2194 = vmatmul.f32.gmra.mxu0 %v2110
        %v2195 = vpop.f32.mrf.mxu0
        %v2196 = vadd.f32 %v2152, %v2195
        %2197 = vmatmul.f32.gmra.mxu0 %v2111
        %v2198 = vpop.f32.mrf.mxu0
        %v2199 = vadd.f32 %v2152, %v2198
        %2200 = vmatmul.f32.gmra.mxu0 %v2112
        %v2201 = vpop.f32.mrf.mxu0
        %v2202 = vadd.f32 %v2152, %v2201
        %2203 = vmatmul.f32.gmra.mxu0 %v2113
        %v2204 = vpop.f32.mrf.mxu0
        %v2205 = vadd.f32 %v2152, %v2204
        %2206 = vmatmul.f32.gmra.mxu0 %v2114
        %v2207 = vpop.f32.mrf.mxu0
        %v2208 = vadd.f32 %v2152, %v2207
        %2209 = vmatmul.f32.gmra.mxu0 %v2115
        %v2210 = vpop.f32.mrf.mxu0
        %v2211 = vadd.f32 %v2152, %v2210
        %2212 = vmatmul.f32.gmra.mxu0 %v2116
        %v2213 = vpop.f32.mrf.mxu0
        %v2214 = vadd.f32 %v2152, %v2213
        %2215 = vmatmul.f32.gmra.mxu0 %v2117
        %v2216 = vpop.f32.mrf.mxu0
        %v2217 = vadd.f32 %v2152, %v2216
        %2218 = vmatmul.f32.gmra.mxu0 %v2118
        %v2219 = vpop.f32.mrf.mxu0
        %v2220 = vadd.f32 %v2152, %v2219
        %2221 = vmatmul.f32.gmra.mxu0 %v2119
        %v2222 = vpop.f32.mrf.mxu0
        %v2223 = vadd.f32 %v2152, %v2222
        %2224 = vmatmul.f32.gmra.mxu0 %v2120
        %v2225 = vpop.f32.mrf.mxu0
        %v2226 = vadd.f32 %v2152, %v2225
        %2227 = vmatmul.f32.gmra.mxu0 %v2121
        %v2228 = vpop.f32.mrf.mxu0
        %v2229 = vadd.f32 %v2152, %v2228
        %2230 = vmatmul.f32.gmra.mxu0 %v2122
        %v2231 = vpop.f32.mrf.mxu0
        %v2232 = vadd.f32 %v2152, %v2231
        %2233 = vmatmul.f32.gmra.mxu0 %v2123
        %v2234 = vpop.f32.mrf.mxu0
        %v2235 = vadd.f32 %v2152, %v2234
        %2236 = vmatmul.f32.gmra.mxu0 %v2124
        %v2237 = vpop.f32.mrf.mxu0
        %v2238 = vadd.f32 %v2152, %v2237
        %2239 = vmatmul.f32.gmra.mxu0 %v2125
        %v2240 = vpop.f32.mrf.mxu0
        %v2241 = vadd.f32 %v2152, %v2240
        %2242 = vmatmul.f32.gmra.mxu0 %v2126
        %v2243 = vpop.f32.mrf.mxu0
        %v2244 = vadd.f32 %v2152, %v2243
        %2245 = vmatmul.f32.gmra.mxu0 %v2127
        %v2246 = vpop.f32.mrf.mxu0
        %v2247 = vadd.f32 %v2152, %v2246
        %2248 = vmatmul.f32.gmra.mxu0 %v2128
        %v2249 = vpop.f32.mrf.mxu0
        %v2250 = vadd.f32 %v2152, %v2249
        %2251 = vmatmul.f32.gmra.mxu0 %v2129
        %v2252 = vpop.f32.mrf.mxu0
        %v2253 = vadd.f32 %v2152, %v2252
        %2254 = vmatmul.f32.gmra.mxu0 %v2130
        %v2255 = vpop.f32.mrf.mxu0
        %v2256 = vadd.f32 %v2152, %v2255
        %2257 = vmatmul.f32.gmra.mxu0 %v2131
        %v2258 = vpop.f32.mrf.mxu0
        %v2259 = vadd.f32 %v2152, %v2258
        %2260 = vmatmul.f32.gmra.mxu0 %v2132
        %v2261 = vpop.f32.mrf.mxu0
        %v2262 = vadd.f32 %v2152, %v2261
        %2263 = vmatmul.f32.gmra.mxu0 %v2133
        %v2264 = vpop.f32.mrf.mxu0
        %v2265 = vadd.f32 %v2152, %v2264
        %2266 = vdwg.mxu0
        %vm2267 = vcmp.gt.f32.partialorder %v2172, 0.0
        %vm2268 = vcmp.gt.f32.partialorder %v2175, 0.0
        %vm2269 = vcmp.gt.f32.partialorder %v2178, 0.0
        %vm2270 = vcmp.gt.f32.partialorder %v2181, 0.0
        %vm2271 = vcmp.gt.f32.partialorder %v2184, 0.0
        %vm2272 = vcmp.gt.f32.partialorder %v2187, 0.0
        %vm2273 = vcmp.gt.f32.partialorder %v2190, 0.0
        %vm2274 = vcmp.gt.f32.partialorder %v2193, 0.0
        %vm2275 = vcmp.gt.f32.partialorder %v2196, 0.0
        %vm2276 = vcmp.gt.f32.partialorder %v2199, 0.0
        %vm2277 = vcmp.gt.f32.partialorder %v2202, 0.0
        %vm2278 = vcmp.gt.f32.partialorder %v2205, 0.0
        %vm2279 = vcmp.gt.f32.partialorder %v2208, 0.0
        %vm2280 = vcmp.gt.f32.partialorder %v2211, 0.0
        %vm2281 = vcmp.gt.f32.partialorder %v2214, 0.0
        %vm2282 = vcmp.gt.f32.partialorder %v2217, 0.0
        %vm2283 = vcmp.gt.f32.partialorder %v2220, 0.0
        %vm2284 = vcmp.gt.f32.partialorder %v2223, 0.0
        %vm2285 = vcmp.gt.f32.partialorder %v2226, 0.0
        %vm2286 = vcmp.gt.f32.partialorder %v2229, 0.0
        %vm2287 = vcmp.gt.f32.partialorder %v2232, 0.0
        %vm2288 = vcmp.gt.f32.partialorder %v2235, 0.0
        %vm2289 = vcmp.gt.f32.partialorder %v2238, 0.0
        %vm2290 = vcmp.gt.f32.partialorder %v2241, 0.0
        %vm2291 = vcmp.gt.f32.partialorder %v2244, 0.0
        %vm2292 = vcmp.gt.f32.partialorder %v2247, 0.0
        %vm2293 = vcmp.gt.f32.partialorder %v2250, 0.0
        %vm2294 = vcmp.gt.f32.partialorder %v2253, 0.0
        %vm2295 = vcmp.gt.f32.partialorder %v2256, 0.0
        %vm2296 = vcmp.gt.f32.partialorder %v2259, 0.0
        %vm2297 = vcmp.gt.f32.partialorder %v2262, 0.0
        %vm2298 = vcmp.gt.f32.partialorder %v2265, 0.0
        %v2299 = vsel %vm2267, 0.0, %v2172
        %v2300 = vsel %vm2268, 0.0, %v2175
        %v2301 = vsel %vm2269, 0.0, %v2178
        %v2302 = vsel %vm2270, 0.0, %v2181
        %v2303 = vsel %vm2271, 0.0, %v2184
        %v2304 = vsel %vm2272, 0.0, %v2187
        %v2305 = vsel %vm2273, 0.0, %v2190
        %v2306 = vsel %vm2274, 0.0, %v2193
        %v2307 = vsel %vm2275, 0.0, %v2196
        %v2308 = vsel %vm2276, 0.0, %v2199
        %v2309 = vsel %vm2277, 0.0, %v2202
        %v2310 = vsel %vm2278, 0.0, %v2205
        %v2311 = vsel %vm2279, 0.0, %v2208
        %v2312 = vsel %vm2280, 0.0, %v2211
        %v2313 = vsel %vm2281, 0.0, %v2214
        %v2314 = vsel %vm2282, 0.0, %v2217
        %v2315 = vsel %vm2283, 0.0, %v2220
        %v2316 = vsel %vm2284, 0.0, %v2223
        %v2317 = vsel %vm2285, 0.0, %v2226
        %v2318 = vsel %vm2286, 0.0, %v2229
        %v2319 = vsel %vm2287, 0.0, %v2232
        %v2320 = vsel %vm2288, 0.0, %v2235
        %v2321 = vsel %vm2289, 0.0, %v2238
        %v2322 = vsel %vm2290, 0.0, %v2241
        %v2323 = vsel %vm2291, 0.0, %v2244
        %v2324 = vsel %vm2292, 0.0, %v2247
        %v2325 = vsel %vm2293, 0.0, %v2250
        %v2326 = vsel %vm2294, 0.0, %v2253
        %v2327 = vsel %vm2295, 0.0, %v2256
        %v2328 = vsel %vm2296, 0.0, %v2259
        %v2329 = vsel %vm2297, 0.0, %v2262
        %v2330 = vsel %vm2298, 0.0, %v2265
        %v2331 = vmul.f32 %v2299, 1.442695
        %v2332 = vpow.pop %v2331
        %v2333 = vmul.f32 %v2300, 1.442695
        %v2334 = vpow.pop %v2333
        %v2335 = vmul.f32 %v2301, 1.442695
        %v2336 = vpow.pop %v2335
        %v2337 = vmul.f32 %v2302, 1.442695
        %v2338 = vpow.pop %v2337
        %v2339 = vmul.f32 %v2303, 1.442695
        %v2340 = vpow.pop %v2339
        %v2341 = vmul.f32 %v2304, 1.442695
        %v2342 = vpow.pop %v2341
        %v2343 = vmul.f32 %v2305, 1.442695
        %v2344 = vpow.pop %v2343
        %v2345 = vmul.f32 %v2306, 1.442695
        %v2346 = vpow.pop %v2345
        %v2347 = vmul.f32 %v2307, 1.442695
        %v2348 = vpow.pop %v2347
        %v2349 = vmul.f32 %v2308, 1.442695
        %v2350 = vpow.pop %v2349
        %v2351 = vmul.f32 %v2309, 1.442695
        %v2352 = vpow.pop %v2351
        %v2353 = vmul.f32 %v2310, 1.442695
        %v2354 = vpow.pop %v2353
        %v2355 = vmul.f32 %v2311, 1.442695
        %v2356 = vpow.pop %v2355
        %v2357 = vmul.f32 %v2312, 1.442695
        %v2358 = vpow.pop %v2357
        %v2359 = vmul.f32 %v2313, 1.442695
        %v2360 = vpow.pop %v2359
        %v2361 = vmul.f32 %v2314, 1.442695
        %v2362 = vpow.pop %v2361
        %v2363 = vmul.f32 %v2315, 1.442695
        %v2364 = vpow.pop %v2363
        %v2365 = vmul.f32 %v2316, 1.442695
        %v2366 = vpow.pop %v2365
        %v2367 = vmul.f32 %v2317, 1.442695
        %v2368 = vpow.pop %v2367
        %v2369 = vmul.f32 %v2318, 1.442695
        %v2370 = vpow.pop %v2369
        %v2371 = vmul.f32 %v2319, 1.442695
        %v2372 = vpow.pop %v2371
        %v2373 = vmul.f32 %v2320, 1.442695
        %v2374 = vpow.pop %v2373
        %v2375 = vmul.f32 %v2321, 1.442695
        %v2376 = vpow.pop %v2375
        %v2377 = vmul.f32 %v2322, 1.442695
        %v2378 = vpow.pop %v2377
        %v2379 = vmul.f32 %v2323, 1.442695
        %v2380 = vpow.pop %v2379
        %v2381 = vmul.f32 %v2324, 1.442695
        %v2382 = vpow.pop %v2381
        %v2383 = vmul.f32 %v2325, 1.442695
        %v2384 = vpow.pop %v2383
        %v2385 = vmul.f32 %v2326, 1.442695
        %v2386 = vpow.pop %v2385
        %v2387 = vmul.f32 %v2327, 1.442695
        %v2388 = vpow.pop %v2387
        %v2389 = vmul.f32 %v2328, 1.442695
        %v2390 = vpow.pop %v2389
        %v2391 = vmul.f32 %v2329, 1.442695
        %v2392 = vpow.pop %v2391
        %v2393 = vmul.f32 %v2330, 1.442695
        %v2394 = vpow.pop %v2393
        %v2395 = vsub.f32 %v2332, 1.0
        %v2396 = vsub.f32 %v2334, 1.0
        %v2397 = vsub.f32 %v2336, 1.0
        %v2398 = vsub.f32 %v2338, 1.0
        %v2399 = vsub.f32 %v2340, 1.0
        %v2400 = vsub.f32 %v2342, 1.0
        %v2401 = vsub.f32 %v2344, 1.0
        %v2402 = vsub.f32 %v2346, 1.0
        %v2403 = vsub.f32 %v2348, 1.0
        %v2404 = vsub.f32 %v2350, 1.0
        %v2405 = vsub.f32 %v2352, 1.0
        %v2406 = vsub.f32 %v2354, 1.0
        %v2407 = vsub.f32 %v2356, 1.0
        %v2408 = vsub.f32 %v2358, 1.0
        %v2409 = vsub.f32 %v2360, 1.0
        %v2410 = vsub.f32 %v2362, 1.0
        %v2411 = vsub.f32 %v2364, 1.0
        %v2412 = vsub.f32 %v2366, 1.0
        %v2413 = vsub.f32 %v2368, 1.0
        %v2414 = vsub.f32 %v2370, 1.0
        %v2415 = vsub.f32 %v2372, 1.0
        %v2416 = vsub.f32 %v2374, 1.0
        %v2417 = vsub.f32 %v2376, 1.0
        %v2418 = vsub.f32 %v2378, 1.0
        %v2419 = vsub.f32 %v2380, 1.0
        %v2420 = vsub.f32 %v2382, 1.0
        %v2421 = vsub.f32 %v2384, 1.0
        %v2422 = vsub.f32 %v2386, 1.0
        %v2423 = vsub.f32 %v2388, 1.0
        %v2424 = vsub.f32 %v2390, 1.0
        %v2425 = vsub.f32 %v2392, 1.0
        %v2426 = vsub.f32 %v2394, 1.0
        %v2427 = vsel %vm2267, %v2172, %v2395
        %v2428 = vsel %vm2268, %v2175, %v2396
        %v2429 = vsel %vm2269, %v2178, %v2397
        %v2430 = vsel %vm2270, %v2181, %v2398
        %v2431 = vsel %vm2271, %v2184, %v2399
        %v2432 = vsel %vm2272, %v2187, %v2400
        %v2433 = vsel %vm2273, %v2190, %v2401
        %v2434 = vsel %vm2274, %v2193, %v2402
        %v2435 = vsel %vm2275, %v2196, %v2403
        %v2436 = vsel %vm2276, %v2199, %v2404
        %v2437 = vsel %vm2277, %v2202, %v2405
        %v2438 = vsel %vm2278, %v2205, %v2406
        %v2439 = vsel %vm2279, %v2208, %v2407
        %v2440 = vsel %vm2280, %v2211, %v2408
        %v2441 = vsel %vm2281, %v2214, %v2409
        %v2442 = vsel %vm2282, %v2217, %v2410
        %v2443 = vsel %vm2283, %v2220, %v2411
        %v2444 = vsel %vm2284, %v2223, %v2412
        %v2445 = vsel %vm2285, %v2226, %v2413
        %v2446 = vsel %vm2286, %v2229, %v2414
        %v2447 = vsel %vm2287, %v2232, %v2415
        %v2448 = vsel %vm2288, %v2235, %v2416
        %v2449 = vsel %vm2289, %v2238, %v2417
        %v2450 = vsel %vm2290, %v2241, %v2418
        %v2451 = vsel %vm2291, %v2244, %v2419
        %v2452 = vsel %vm2292, %v2247, %v2420
        %v2453 = vsel %vm2293, %v2250, %v2421
        %v2454 = vsel %vm2294, %v2253, %v2422
        %v2455 = vsel %vm2295, %v2256, %v2423
        %v2456 = vsel %vm2296, %v2259, %v2424
        %v2457 = vsel %vm2297, %v2262, %v2425
        %v2458 = vsel %vm2298, %v2265, %v2426
        %v2459 = vld [vmem:[%s8] sm:$0xff]
        %v2460 = vld [vmem:[%s8 + $0x8] sm:$0xff]
        %v2461 = vld [vmem:[%s8 + $0x10] sm:$0xff]
        %v2462 = vld [vmem:[%s8 + $0x18] sm:$0xff]
        %v2463 = vld [vmem:[%s8 + $0x20] sm:$0xff]
        %v2464 = vld [vmem:[%s8 + $0x28] sm:$0xff]
        %v2465 = vld [vmem:[%s8 + $0x30] sm:$0xff]
        %v2466 = vld [vmem:[%s8 + $0x38] sm:$0xff]
        %v2467 = vld [vmem:[%s8 + $0x40] sm:$0xff]
        %v2468 = vld [vmem:[%s8 + $0x48] sm:$0xff]
        %v2469 = vld [vmem:[%s8 + $0x50] sm:$0xff]
        %v2470 = vld [vmem:[%s8 + $0x58] sm:$0xff]
        %v2471 = vld [vmem:[%s8 + $0x60] sm:$0xff]
        %v2472 = vld [vmem:[%s8 + $0x68] sm:$0xff]
        %v2473 = vld [vmem:[%s8 + $0x70] sm:$0xff]
        %v2474 = vld [vmem:[%s8 + $0x78] sm:$0xff]
        %v2475 = vld [vmem:[%s9] sm:$0x1]
        %v2477 = vperm.slane %v2475, 0
        %2479 = vmatpush.msra.mxu0 %v2474
        %2480 = vmatpush.msra.mxu0 %v2473
        %2481 = vmatpush.msra.mxu0 %v2472
        %2482 = vmatpush.msra.mxu0 %v2471
        %2483 = vmatpush.msra.mxu0 %v2470
        %2484 = vmatpush.msra.mxu0 %v2469
        %2485 = vmatpush.msra.mxu0 %v2468
        %2486 = vmatpush.msra.mxu0 %v2467
        %2487 = vmatpush.msra.mxu0 %v2466
        %2488 = vmatpush.msra.mxu0 %v2465
        %2489 = vmatpush.msra.mxu0 %v2464
        %2490 = vmatpush.msra.mxu0 %v2463
        %2491 = vmatpush.msra.mxu0 %v2462
        %2492 = vmatpush.msra.mxu0 %v2461
        %2493 = vmatpush.msra.mxu0 %v2460
        %2494 = vmatpush.msra.mxu0 %v2459
        %2495 = vmatmul.f32.gmra.mxu0 %v2427
        %v2496 = vpop.f32.mrf.mxu0
        %v2497 = vadd.f32 %v2477, %v2496
        %2498 = vmatmul.f32.gmra.mxu0 %v2428
        %v2499 = vpop.f32.mrf.mxu0
        %v2500 = vadd.f32 %v2477, %v2499
        %2501 = vmatmul.f32.gmra.mxu0 %v2429
        %v2502 = vpop.f32.mrf.mxu0
        %v2503 = vadd.f32 %v2477, %v2502
        %2504 = vmatmul.f32.gmra.mxu0 %v2430
        %v2505 = vpop.f32.mrf.mxu0
        %v2506 = vadd.f32 %v2477, %v2505
        %2507 = vmatmul.f32.gmra.mxu0 %v2431
        %v2508 = vpop.f32.mrf.mxu0
        %v2509 = vadd.f32 %v2477, %v2508
        %2510 = vmatmul.f32.gmra.mxu0 %v2432
        %v2511 = vpop.f32.mrf.mxu0
        %v2512 = vadd.f32 %v2477, %v2511
        %2513 = vmatmul.f32.gmra.mxu0 %v2433
        %v2514 = vpop.f32.mrf.mxu0
        %v2515 = vadd.f32 %v2477, %v2514
        %2516 = vmatmul.f32.gmra.mxu0 %v2434
        %v2517 = vpop.f32.mrf.mxu0
        %v2518 = vadd.f32 %v2477, %v2517
        %2519 = vmatmul.f32.gmra.mxu0 %v2435
        %v2520 = vpop.f32.mrf.mxu0
        %v2521 = vadd.f32 %v2477, %v2520
        %2522 = vmatmul.f32.gmra.mxu0 %v2436
        %v2523 = vpop.f32.mrf.mxu0
        %v2524 = vadd.f32 %v2477, %v2523
        %2525 = vmatmul.f32.gmra.mxu0 %v2437
        %v2526 = vpop.f32.mrf.mxu0
        %v2527 = vadd.f32 %v2477, %v2526
        %2528 = vmatmul.f32.gmra.mxu0 %v2438
        %v2529 = vpop.f32.mrf.mxu0
        %v2530 = vadd.f32 %v2477, %v2529
        %2531 = vmatmul.f32.gmra.mxu0 %v2439
        %v2532 = vpop.f32.mrf.mxu0
        %v2533 = vadd.f32 %v2477, %v2532
        %2534 = vmatmul.f32.gmra.mxu0 %v2440
        %v2535 = vpop.f32.mrf.mxu0
        %v2536 = vadd.f32 %v2477, %v2535
        %2537 = vmatmul.f32.gmra.mxu0 %v2441
        %v2538 = vpop.f32.mrf.mxu0
        %v2539 = vadd.f32 %v2477, %v2538
        %2540 = vmatmul.f32.gmra.mxu0 %v2442
        %v2541 = vpop.f32.mrf.mxu0
        %v2542 = vadd.f32 %v2477, %v2541
        %2543 = vmatmul.f32.gmra.mxu0 %v2443
        %v2544 = vpop.f32.mrf.mxu0
        %v2545 = vadd.f32 %v2477, %v2544
        %2546 = vmatmul.f32.gmra.mxu0 %v2444
        %v2547 = vpop.f32.mrf.mxu0
        %v2548 = vadd.f32 %v2477, %v2547
        %2549 = vmatmul.f32.gmra.mxu0 %v2445
        %v2550 = vpop.f32.mrf.mxu0
        %v2551 = vadd.f32 %v2477, %v2550
        %2552 = vmatmul.f32.gmra.mxu0 %v2446
        %v2553 = vpop.f32.mrf.mxu0
        %v2554 = vadd.f32 %v2477, %v2553
        %2555 = vmatmul.f32.gmra.mxu0 %v2447
        %v2556 = vpop.f32.mrf.mxu0
        %v2557 = vadd.f32 %v2477, %v2556
        %2558 = vmatmul.f32.gmra.mxu0 %v2448
        %v2559 = vpop.f32.mrf.mxu0
        %v2560 = vadd.f32 %v2477, %v2559
        %2561 = vmatmul.f32.gmra.mxu0 %v2449
        %v2562 = vpop.f32.mrf.mxu0
        %v2563 = vadd.f32 %v2477, %v2562
        %2564 = vmatmul.f32.gmra.mxu0 %v2450
        %v2565 = vpop.f32.mrf.mxu0
        %v2566 = vadd.f32 %v2477, %v2565
        %2567 = vmatmul.f32.gmra.mxu0 %v2451
        %v2568 = vpop.f32.mrf.mxu0
        %v2569 = vadd.f32 %v2477, %v2568
        %2570 = vmatmul.f32.gmra.mxu0 %v2452
        %v2571 = vpop.f32.mrf.mxu0
        %v2572 = vadd.f32 %v2477, %v2571
        %2573 = vmatmul.f32.gmra.mxu0 %v2453
        %v2574 = vpop.f32.mrf.mxu0
        %v2575 = vadd.f32 %v2477, %v2574
        %2576 = vmatmul.f32.gmra.mxu0 %v2454
        %v2577 = vpop.f32.mrf.mxu0
        %v2578 = vadd.f32 %v2477, %v2577
        %2579 = vmatmul.f32.gmra.mxu0 %v2455
        %v2580 = vpop.f32.mrf.mxu0
        %v2581 = vadd.f32 %v2477, %v2580
        %2582 = vmatmul.f32.gmra.mxu0 %v2456
        %v2583 = vpop.f32.mrf.mxu0
        %v2584 = vadd.f32 %v2477, %v2583
        %2585 = vmatmul.f32.gmra.mxu0 %v2457
        %v2586 = vpop.f32.mrf.mxu0
        %v2587 = vadd.f32 %v2477, %v2586
        %2588 = vmatmul.f32.gmra.mxu0 %v2458
        %v2589 = vpop.f32.mrf.mxu0
        %v2590 = vadd.f32 %v2477, %v2589
        %2591 = vdwg.mxu0
        %2592 = vst [vmem:[%s414] sm:$0xff] %v2497
        %2593 = vst [vmem:[%s414 + $0x8] sm:$0xff] %v2500
        %2594 = vst [vmem:[%s414 + $0x10] sm:$0xff] %v2503
        %2595 = vst [vmem:[%s414 + $0x18] sm:$0xff] %v2506
        %2596 = vst [vmem:[%s414 + $0x20] sm:$0xff] %v2509
        %2597 = vst [vmem:[%s414 + $0x28] sm:$0xff] %v2512
        %2598 = vst [vmem:[%s414 + $0x30] sm:$0xff] %v2515
        %2599 = vst [vmem:[%s414 + $0x38] sm:$0xff] %v2518
        %2600 = vst [vmem:[%s414 + $0x40] sm:$0xff] %v2521
        %2601 = vst [vmem:[%s414 + $0x48] sm:$0xff] %v2524
        %2602 = vst [vmem:[%s414 + $0x50] sm:$0xff] %v2527
        %2603 = vst [vmem:[%s414 + $0x58] sm:$0xff] %v2530
        %2604 = vst [vmem:[%s414 + $0x60] sm:$0xff] %v2533
        %2605 = vst [vmem:[%s414 + $0x68] sm:$0xff] %v2536
        %2606 = vst [vmem:[%s414 + $0x70] sm:$0xff] %v2539
        %2607 = vst [vmem:[%s414 + $0x78] sm:$0xff] %v2542
        %2608 = vst [vmem:[%s414 + $0x80] sm:$0xff] %v2545
        %2609 = vst [vmem:[%s414 + $0x88] sm:$0xff] %v2548
        %2610 = vst [vmem:[%s414 + $0x90] sm:$0xff] %v2551
        %2611 = vst [vmem:[%s414 + $0x98] sm:$0xff] %v2554
        %2612 = vst [vmem:[%s414 + $0xa0] sm:$0xff] %v2557
        %2613 = vst [vmem:[%s414 + $0xa8] sm:$0xff] %v2560
        %2614 = vst [vmem:[%s414 + $0xb0] sm:$0xff] %v2563
        %2615 = vst [vmem:[%s414 + $0xb8] sm:$0xff] %v2566
        %2616 = vst [vmem:[%s414 + $0xc0] sm:$0xff] %v2569
        %2617 = vst [vmem:[%s414 + $0xc8] sm:$0xff] %v2572
        %2618 = vst [vmem:[%s414 + $0xd0] sm:$0xff] %v2575
        %2619 = vst [vmem:[%s414 + $0xd8] sm:$0xff] %v2578
        %2620 = vst [vmem:[%s414 + $0xe0] sm:$0xff] %v2581
        %2621 = vst [vmem:[%s414 + $0xe8] sm:$0xff] %v2584
        %2622 = vst [vmem:[%s414 + $0xf0] sm:$0xff] %v2587
        %2623 = vst [vmem:[%s414 + $0xf8] sm:$0xff] %v2590
      $region68: #{custom_gnn_forward.1} parent=59 // pred_fallthru
        _
      %s2624 = smul.u32 32, %s25
      %p2625 = scmp.lt.s32.totalorder %s2624, 63
      %s2626 = scalar_select %p2625, %s2624, 63
      %s2627 = smul.addr %s2626, 8
      %s2628 = scalar_lea.vmem %s10, %s2627
      // Predicated region
      $region69: #{custom_gnn_forward.1} parent=59 // pred_check
        %p2629 = pneg %p273
      $region70: #{custom_gnn_forward.1} parent=59 // pred_check_branch
        %2631 = sbr.rel (%p2629) target = $region72
      $region71: #{custom_gnn_forward.1} parent=59 // pred_region
        %s2632 = smul.u32 32, %s25
      $region72: #{custom_gnn_forward.1} parent=59 // pred_fallthru
        _
    $region60: #{custom_gnn_forward.1} parent=5 // pred_fallthru
      _
    %p2633 = scmp.le.s32.totalorder 2, %s16
    // Predicated region
    $region73: #{custom_gnn_forward.1} parent=5 // pred_check
      %p2634 = pneg %p2633
    $region74: #{custom_gnn_forward.1} parent=5 // pred_check_branch
      %2636 = sbr.rel (%p2634) target = $region76
    $region75: #{custom_gnn_forward.1} parent=5 // pred_region
      %s2637 = ssub.s32 %s16, 2
      // Predicated region
      $region77: #{custom_gnn_forward.1} parent=75 // pred_check
        %p2638 = pneg %p279
      $region78: #{custom_gnn_forward.1} parent=75 // pred_check_branch
        %2640 = sbr.rel (%p2638) target = $region80
      $region79: #{custom_gnn_forward.1} parent=75 // pred_region
        %s2641 = smul.u32 32, %s27
        %p2642 = scmp.lt.s32.totalorder %s2641, 63
        %s2643 = scalar_select %p2642, %s2641, 63
        %s2644 = smul.addr %s2643, 8
        %s2645 = scalar_lea.vmem %s10, %s2644
      $region80: #{custom_gnn_forward.1} parent=75 // pred_fallthru
        _
    $region76: #{custom_gnn_forward.1} parent=5 // pred_fallthru
      _
  $region6: #{custom_gnn_forward.1} parent=0 // loop_footer
    %s20 = sadd.s32 1, %s16
  $region7: #{custom_gnn_forward.1} parent=0 // loop_footer_branch
    %15 = sbr.rel target = $region3
  $region8: #{custom_gnn_forward.1} parent=0 // loop_exit
    _

</llo_original>
